<compile_context>
chip_gen: v7x
topology: tpu7x:2x2x1
jax: 0.10.0
libtpu: 0.0.40
codegen_flags: <defaults>
</compile_context>

<pallas_src>
import math
from typing import NamedTuple

import numpy as np
import jax
import jax.numpy as jnp
from jax.experimental import pallas as pl
from jax.experimental.pallas import tpu as pltpu


def _round_up(x, m):
    return (x + m - 1) // m * m


class PosEncodingParams(NamedTuple):
    inv_base: np.ndarray    # (dim,) f32, = 1 / base  (host-precomputed reciprocal)
    sft: np.ndarray         # (dim,) f32
    binv_aug: jax.Array     # (K, lanes) f32: rows 0..fold-1 = masked inv_base,
                            #                 row fold = tiled sft, rest zeros
    fold: int               # positions packed per lane-dense output row
    dim: int
    lanes: int              # fold * dim, multiple of 128 (unless fallback)
    kdim: int               # contraction dim K = round_up(fold + 1, 8)


def make_pos_encoding_params(dim, base=10000, bias=0.0, *,
                             target_lanes=512, max_lanes=4096):
    """Mirror of PosEncoding.__init__ plus kernel-layout constants."""
    idx = np.arange(dim)
    b = (idx - idx % 2) / float(dim)
    inv_base = (float(base) ** b).astype(np.float32)          # 1 / (base ** -b)
    sft = np.where(idx % 2 == 1, np.pi / 2.0 + bias, float(bias)).astype(np.float32)

    # Lane-dense folding for ANY dim: lanes = lcm(dim, 128), widened toward
    # ~target_lanes so each output row is several unmasked 128-lane vregs.
    base_lanes = dim * 128 // math.gcd(dim, 128)
    if base_lanes <= max_lanes:
        lanes = base_lanes * max(1, target_lanes // base_lanes)
    else:
        # TODO(synk): dims with a huge lcm(dim,128) fall back to masked stores.
        lanes = dim
    fold = lanes // dim

    # Augmented constant matrix for the single-matmul formulation:
    #   x = [pos_fold | 1 | 0...] @ [masked inv_base rows ; sft row ; 0 rows]
    kdim = _round_up(fold + 1, 8)
    binv = np.zeros((kdim, lanes), dtype=np.float32)
    for g in range(fold):
        binv[g, g * dim:(g + 1) * dim] = inv_base
    binv[fold, :] = np.tile(sft, fold)

    return PosEncodingParams(inv_base=inv_base, sft=sft,
                             binv_aug=jnp.asarray(binv),
                             fold=fold, dim=dim, lanes=lanes, kdim=kdim)


def _pos_encoding_kernel(pos_ref, binv_ref, out_ref):
    # pos_ref:  (tr, K)      f32  -- fold positions per row, then a ones column
    # binv_ref: (K, lanes)   f32  -- masked inv_base rows + sft row (resident)
    # out_ref:  (tr, lanes)  out_dtype
    # One MXU contraction builds the whole sin argument for the tile; HIGHEST
    # precision keeps it f32-accurate (default bf16 single-pass would wreck
    # the argument for |x| >> 1).  The VALU only runs the sin polynomial.
    x = jnp.dot(pos_ref[...], binv_ref[...],
                preferred_element_type=jnp.float32,
                precision=jax.lax.Precision.HIGHEST)
    out_ref[...] = jnp.sin(x).astype(out_ref.dtype)


def pos_encoding(pos, params, *, block_rows=4096, out_dtype=jnp.float32,
                 vmem_budget_bytes=12 << 20):
    """pos: arbitrary-shaped positions (array or list) -> (N, dim) encoding.

    Matches PosEncoding.forward: sin(pos.view(-1, 1) * inv_base + sft).
    out_dtype=jnp.bfloat16 halves HBM write traffic if the consumer allows it.
    """
    pos_flat = jnp.asarray(pos, dtype=jnp.float32).reshape(-1)   # handles lists
    n = int(pos_flat.shape[0])
    fold, dim, lanes, kdim = params.fold, params.dim, params.lanes, params.kdim

    nf = max(1, _round_up(n, fold) // fold)                      # folded rows needed

    # ---- tile sizing (correct VMEM accounting) ------------------------------
    # Per folded row in VMEM: output block = lanes * itemsize, pos block is
    # lane-PADDED to 128 lanes (not kdim).  Both are double-buffered.  Keep the
    # total <= ~12 MiB so it fits every chip's default scoped VMEM limit.
    out_row = lanes * jnp.dtype(out_dtype).itemsize
    pos_row = _round_up(kdim, 128) * 4
    cap_rows = max(8, (vmem_budget_bytes // (2 * (out_row + pos_row))) // 8 * 8)

    tr = max(8, min(_round_up(block_rows, 8), cap_rows, _round_up(nf, 8)))
    # Guarantee >= 2 grid steps when there is enough work, so the "parallel"
    # axis can actually be split across v7x's two TensorCores.
    if nf > 8 and nf <= tr:
        tr = max(8, _round_up((nf + 1) // 2, 8))

    nf_pad = _round_up(nf, tr)
    n_pad = nf_pad * fold

    # Fold positions into rows and append the ones column (+ zero K-padding).
    p = jnp.pad(pos_flat, (0, n_pad - n)).reshape(nf_pad, fold)
    pos_aug = jnp.concatenate(
        [p,
         jnp.ones((nf_pad, 1), jnp.float32),
         jnp.zeros((nf_pad, kdim - fold - 1), jnp.float32)], axis=1)

    out_folded = pl.pallas_call(
        _pos_encoding_kernel,
        out_shape=jax.ShapeDtypeStruct((nf_pad, lanes), out_dtype),
        grid_spec=pltpu.PrefetchScalarGridSpec(
            num_scalar_prefetch=0,
            grid=(nf_pad // tr,),
            in_specs=[
                pl.BlockSpec((tr, kdim), lambda i: (i, 0)),       # positions
                pl.BlockSpec((kdim, lanes), lambda i: (0, 0)),    # constants (resident)
            ],
            out_specs=pl.BlockSpec((tr, lanes), lambda i: (i, 0)),
        ),
        compiler_params=pltpu.CompilerParams(
            # 1-D parallel grid: shardable across v7x's two TensorCores,
            # harmless on single-core v5e/v6e.  (Raise block_rows together
            # with vmem_limit_bytes here if targeting v6e specifically.)
            dimension_semantics=("parallel",),
        ),
    )(pos_aug, params.binv_aug)

    # (nf_pad, fold*dim) is the row-major view of (n_pad, dim): free un-fold,
    # then drop the padded rows.
    return out_folded.reshape(n_pad, dim)[:n]


if __name__ == "__main__":
    dim = 32       # -> lanes = 512, fold = 16 (lane-dense, multi-vreg rows)
    n_pos = 1000   # deliberately not tile-aligned (exercises padding + slice)

    params = make_pos_encoding_params(dim, base=10000, bias=0.0)

    key = jax.random.PRNGKey(0)
    pos = jax.random.randint(key, (n_pos,), 0, 16).astype(jnp.float32)

    out = pos_encoding(pos, params)
    out = jax.block_until_ready(out)
    assert out.shape == (n_pos, dim) and out.dtype == jnp.float32

    # ---- reference check ----------------------------------------------------
    # Ground truth: float64 sin of the argument built from the same f32
    # constants the kernel (and the torch module) stores.
    pos64 = np.asarray(pos, dtype=np.float64)
    x = (pos64[:, None] * params.inv_base.astype(np.float64)[None, :]
         + params.sft.astype(np.float64)[None, :])
    ref = np.sin(x)

    # f32 sin of |x| >> 2*pi is only determined to a few ulps of the argument;
    # the MXU (HIGHEST-precision) argument may differ from the scalar f32 path
    # by another ~1-2 ulps.  Budget 16 ulps of |x| + a small absolute floor.
    tol = 1e-5 + 16.0 * np.spacing(np.abs(x).astype(np.float32)).astype(np.float64)
    err = np.abs(np.asarray(out, dtype=np.float64) - ref)
    if not np.all(err <= tol):
        worst = np.unravel_index(np.argmax(err - tol), err.shape)
        raise AssertionError(
            f"mismatch at {worst}: err={err[worst]:.3e} tol={tol[worst]:.3e}")

    print("KERNEL_OK")
</pallas_src>

<mosaic_0001>
module attributes {stable_mosaic.version = 11 : i64} {
  func.func @_pos_encoding_kernel(%arg0: i32, %arg1: memref<32x24xf32, #tpu.memory_space<vmem>>, %arg2: memref<24x512xf32, #tpu.memory_space<vmem>>, %arg3: memref<32x512xf32, #tpu.memory_space<vmem>>) attributes {dimension_semantics = [#tpu.dimension_semantics<parallel>], iteration_bounds = array<i64: 2>, scalar_prefetch = 0 : i64, scratch_operands = 0 : i64, tpu.core_type = #tpu.core_type<tc>, window_params = [{transform_indices = @transform_0, window_bounds = array<i64: 32, 24>}, {pipeline_mode = #tpu.pipeline_mode<synchronous>, transform_indices = @transform_1, window_bounds = array<i64: 24, 512>}, {transform_indices = @transform_2, window_bounds = array<i64: 32, 512>}]} {
    %c0 = arith.constant 0 : index
    %c0_0 = arith.constant 0 : index
    %0 = vector.load %arg1[%c0, %c0_0] : memref<32x24xf32, #tpu.memory_space<vmem>>, vector<32x24xf32>
    %c0_1 = arith.constant 0 : index
    %c0_2 = arith.constant 0 : index
    %1 = vector.load %arg2[%c0_1, %c0_2] : memref<24x512xf32, #tpu.memory_space<vmem>>, vector<24x512xf32>
    %cst = arith.constant dense<0.000000e+00> : vector<32x512xf32>
    %2 = tpu.matmul %0, %1, %cst {dimension_numbers = #tpu.dot_dimension_numbers<[1], [0], [0], [1], [0, 0, 1, 1], [], []>, precision = #tpu.contract_precision<fp32>} : vector<32x24xf32>, vector<24x512xf32>, vector<32x512xf32> -> vector<32x512xf32>
    %3 = math.sin %2 : vector<32x512xf32>
    %c0_3 = arith.constant 0 : index
    %c0_4 = arith.constant 0 : index
    %4 = vector.load %arg3[%c0_3, %c0_4] : memref<32x512xf32, #tpu.memory_space<vmem>>, vector<32x512xf32>
    tpu.vector_store %arg3[%c0_3, %c0_4], %3 {strides = array<i32>} : memref<32x512xf32, #tpu.memory_space<vmem>>, vector<32x512xf32>,
    return
  }
  func.func @transform_0(%arg0: i32) -> (i32, i32) {
    %c0_i32 = arith.constant 0 : i32
    %c0_i32_0 = arith.constant 0 : i32
    return %arg0, %c0_i32 : i32, i32
  }
  func.func @transform_1(%arg0: i32) -> (i32, i32) {
    %c0_i32 = arith.constant 0 : i32
    %c0_i32_0 = arith.constant 0 : i32
    %c0_i32_1 = arith.constant 0 : i32
    return %c0_i32, %c0_i32_0 : i32, i32
  }
  func.func @transform_2(%arg0: i32) -> (i32, i32) {
    %c0_i32 = arith.constant 0 : i32
    %c0_i32_0 = arith.constant 0 : i32
    return %arg0, %c0_i32 : i32, i32
  }
}

</mosaic_0001>

<llo_original>
// kernel: tpu_custom_call.1
$region0: #{tpu_custom_call.1}
  #allocation0 [shape = 'u32[]', space=smem, size = 0x4, offset = 0x4, fixed_abs, tag = 'smem constant byte address 0x4 - core index']
  #allocation1 [shape = 'u32[144,128]{1,0:T(1,128)}', space=vmem, size = 0x12000, scoped, tag = 'internal scratch']
  %s0 = inlined_call_operand.vmem [shape: f32[64,24], index: 0, kind: input, shape index: {}]
  %s1 = inlined_call_operand.hbm [shape: f32[24,512], index: 1, kind: input, shape index: {}]
  %s2 = inlined_call_operand.hbm [shape: f32[64,512], index: 2, kind: output, shape index: {}]
  %s3 = sld [smem:[#allocation0]]
  $region45: #{tpu_custom_call.1} parent=0
    _
  %s5 = ssub.s32 1, %s3
  %s6 = scalar_select 0, %s5, %s3
  $region1: #{tpu_custom_call.1} parent=0
    #allocation2 [shape = 'u8[49152]{0}', space=vmem, size = 0xc000, scoped, tag = 'input window, operand 1, single buffered']
    #allocation3 [shape = 's32[2]{0}', space=sflag, size = 0x8, scoped, tag = 'scoped memory for tpu_custom_call.1']
    #allocation4 [shape = 's32[2]{0}', space=sflag, size = 0x8, scoped, tag = 'scoped memory for tpu_custom_call.1']
    #allocation5 [shape = 'u8[131072]{0}', space=vmem, size = 0x20000, scoped, tag = 'output window, operand 0']
    %7 = vsyncpa [#allocation3], 0
    %8 = vsyncpa [#allocation4], 0
    %s9 = scalar_lea.sflag [#allocation4], 1
    %10 = vsyncpa %s9, 0
    loop: start=0, step=1, limit=4
    $region2: #{tpu_custom_call.1} parent=1 // loop_pre_header
      _
    $region3: #{tpu_custom_call.1} parent=1 // loop_header
      %s12 = sphi 0, %s16
      %p13 = scmp.ge.s32.totalorder %s12, 4
      %s22 = sphi 0, %s24
      %s25 = sphi 0, %s22
      %s26 = sphi 0, %s25
      %s42 = sphi 0, %s26
      %s46 = sphi 0, %s46
      %s48 = sphi 0, %s46
      %s49 = sphi 0, %s48
      %s63 = sphi 0, %s49
      %s69 = sphi 0, %s71
      %s72 = sphi 0, %s69
      %s73 = sphi 0, %s72
      %s89 = sphi 0, %s73
    $region4: #{tpu_custom_call.1} parent=1 // loop_header_branch
      %15 = sbr.rel (%p13) target = $region8
    $region5: #{tpu_custom_call.1} parent=1 // loop_body
      %s17 = ssub.s32 %s12, 1
      %s18 = ssub.s32 %s12, 2
      %s19 = sadd.s32 %s12, 1
      %s20 = ssub.s32 %s12, %s19
      %p21 = scmp.eq.s32.totalorder %s20, 0
      %s23 = sadd.s32 %s22, 1
      %s24 = scalar_select %p21, %s22, %s23
      %p27 = pneg %p21
      %p28 = scmp.eq.s32.totalorder %s12, 1
      %p29 = por %p27, %p28
      %p30 = scmp.ne.s32.totalorder %s22, %s25
      %p31 = scmp.eq.s32.totalorder %s12, 0
      %p32 = por %p30, %p31
      %p33 = scmp.ne.s32.totalorder %s22, %s25
      %p34 = scmp.eq.s32.totalorder %s17, 1
      %p35 = por %p33, %p34
      %p36 = scmp.ne.s32.totalorder %s25, %s26
      %p37 = scmp.eq.s32.totalorder %s17, 0
      %p38 = por %p36, %p37
      %p39 = scmp.ne.s32.totalorder %s25, %s26
      %p40 = scmp.eq.s32.totalorder %s18, 1
      %p41 = por %p39, %p40
      %p43 = scmp.ne.s32.totalorder %s26, %s42
      %p44 = scmp.eq.s32.totalorder %s18, 0
      %p45 = por %p43, %p44
      %s47 = sadd.s32 %s46, 1
      %p50 = scmp.eq.s32.totalorder %s12, 1
      %p51 = scmp.ne.s32.totalorder %s46, %s48
      %p52 = scmp.eq.s32.totalorder %s12, 0
      %p53 = por %p51, %p52
      %p54 = scmp.ne.s32.totalorder %s46, %s48
      %p55 = scmp.eq.s32.totalorder %s17, 1
      %p56 = por %p54, %p55
      %p57 = scmp.ne.s32.totalorder %s48, %s49
      %p58 = scmp.eq.s32.totalorder %s17, 0
      %p59 = por %p57, %p58
      %p60 = scmp.ne.s32.totalorder %s48, %s49
      %p61 = scmp.eq.s32.totalorder %s18, 1
      %p62 = por %p60, %p61
      %p64 = scmp.ne.s32.totalorder %s49, %s63
      %p65 = scmp.eq.s32.totalorder %s18, 0
      %p66 = por %p64, %p65
      %s67 = ssub.s32 %s12, %s19
      %p68 = scmp.eq.s32.totalorder %s67, 0
      %s70 = sadd.s32 %s69, 1
      %s71 = scalar_select %p68, %s69, %s70
      %p74 = pneg %p68
      %p75 = scmp.eq.s32.totalorder %s12, 1
      %p76 = por %p74, %p75
      %p77 = scmp.ne.s32.totalorder %s69, %s72
      %p78 = scmp.eq.s32.totalorder %s12, 0
      %p79 = por %p77, %p78
      %p80 = scmp.ne.s32.totalorder %s69, %s72
      %p81 = scmp.eq.s32.totalorder %s17, 1
      %p82 = por %p80, %p81
      %p83 = scmp.ne.s32.totalorder %s72, %s73
      %p84 = scmp.eq.s32.totalorder %s17, 0
      %p85 = por %p83, %p84
      %p86 = scmp.ne.s32.totalorder %s72, %s73
      %p87 = scmp.eq.s32.totalorder %s18, 1
      %p88 = por %p86, %p87
      %p90 = scmp.ne.s32.totalorder %s73, %s89
      %p91 = scmp.eq.s32.totalorder %s18, 0
      %p92 = por %p90, %p91
      %p93 = scmp.le.s32.totalorder 1, %s12
      %p94 = scmp.lt.s32.totalorder %s12, 3
      %p95 = pnand %p93, %p94
      %p96 = pneg %p95
      // Predicated region
      $region9: #{tpu_custom_call.1} parent=5 // pred_check
        _
      $region10: #{tpu_custom_call.1} parent=5 // pred_check_branch
        %98 = sbr.rel (%p95) target = $region12
      $region11: #{tpu_custom_call.1} parent=5 // pred_region
        %s99 = ssub.s32 %s12, 1
        // Predicated region
        $region13: #{tpu_custom_call.1} parent=11 // pred_check
          %p100 = pneg %p59
        $region14: #{tpu_custom_call.1} parent=11 // pred_check_branch
          %102 = sbr.rel (%p100) target = $region16
        $region15: #{tpu_custom_call.1} parent=11 // pred_region
          %s104 = ssub.s32 1536, 1536
          %105 = vsyncadd [#allocation3], %s104
          %s106 = sshll.u32 [#allocation2], 4
          %s107 = int_to_ptr.vmem [resolvable:$true] %s106
          %112 = dma.hbm_to_vmem [thread:$0]  %s1, 1536, %s107, [#allocation3], 512, 512, 32
        $region16: #{tpu_custom_call.1} parent=11 // pred_fallthru
          _
      $region12: #{tpu_custom_call.1} parent=5 // pred_fallthru
        _
      %p113 = scmp.lt.s32.totalorder %s12, 2
      // Predicated region
      $region17: #{tpu_custom_call.1} parent=5 // pred_check
        %p114 = pneg %p113
      $region18: #{tpu_custom_call.1} parent=5 // pred_check_branch
        %116 = sbr.rel (%p114) target = $region20
      $region19: #{tpu_custom_call.1} parent=5 // pred_region
        // Predicated region
        $region21: #{tpu_custom_call.1} parent=19 // pred_check
          %p117 = pneg %p32
        $region22: #{tpu_custom_call.1} parent=19 // pred_check_branch
          %119 = sbr.rel (%p117) target = $region24
        $region23: #{tpu_custom_call.1} parent=19 // pred_region
          %s120 = smul.u32 4, %s12
          %p121 = scmp.lt.s32.totalorder %s120, 7
          %s122 = scalar_select %p121, %s120, 7
          %s123 = smul.addr %s122, 8
          %s124 = scalar_lea.vmem %s0, %s123
          %s125 = smul.u32 4, %s12
        $region24: #{tpu_custom_call.1} parent=19 // pred_fallthru
          _
      $region20: #{tpu_custom_call.1} parent=5 // pred_fallthru
        _
      %p126 = scmp.le.s32.totalorder 1, %s12
      %p127 = scmp.lt.s32.totalorder %s12, 3
      %p128 = pnand %p126, %p127
      %p129 = pneg %p128
      // Predicated region
      $region25: #{tpu_custom_call.1} parent=5 // pred_check
        _
      $region26: #{tpu_custom_call.1} parent=5 // pred_check_branch
        %131 = sbr.rel (%p128) target = $region28
      $region27: #{tpu_custom_call.1} parent=5 // pred_region
        %s132 = ssub.s32 %s12, 1
        // Predicated region
        $region29: #{tpu_custom_call.1} parent=27 // pred_check
          %p133 = pneg %p59
        $region30: #{tpu_custom_call.1} parent=27 // pred_check_branch
          %135 = sbr.rel (%p133) target = $region32
        $region31: #{tpu_custom_call.1} parent=27 // pred_region
          %136 = dma.done [#allocation3], 1536
        $region32: #{tpu_custom_call.1} parent=27 // pred_fallthru
          _
        %s137 = smul.u32 4, %s17
        %p138 = scmp.lt.s32.totalorder %s137, 7
        %s139 = scalar_select %p138, %s137, 7
        %s140 = smul.addr %s139, 8
        %s141 = scalar_lea.vmem %s0, %s140
        %p142 = pneg %p38
        %p143 = pneg %p35
        %p144 = pneg %p59
        %p145 = pneg %p56
        %p146 = pneg %p85
        %p147 = pneg %p82
        %s148 = sand.u32 %s72, 1
        %s149 = scalar_lea.sflag [#allocation4], %s148
        %s150 = sand.u32 %s72, 1
        %s151 = smul.addr %s150, 128
        %s152 = scalar_lea.vmem [#allocation5], %s151
        %s153 = smul.u32 4, %s17
        %p154 = scmp.lt.s32.totalorder %s153, 7
        %s155 = scalar_select %p154, %s153, 7
        %s156 = smul.addr %s155, 8
        %s157 = scalar_lea.vmem %s0, %s156
        %s158 = smul.u32 4, %s17
        %s159 = smul.u32 4, %s17
        %v160 = vld [vmem:[%s157] sm:$0xff]
        %v161 = vld [vmem:[%s157 + $0x8] sm:$0xff]
        %v162 = vld [vmem:[%s157 + $0x10] sm:$0xff]
        %v163 = vld [vmem:[%s157 + $0x18] sm:$0xff]
        %v164 = vld [vmem:[#allocation2] sm:$0xff]
        %v165 = vld [vmem:[#allocation2 + $0x8] sm:$0xff]
        %v166 = vld [vmem:[#allocation2 + $0x10] sm:$0xff]
        %v167 = vld [vmem:[#allocation2 + $0x18] sm:$0xff]
        %v168 = vld [vmem:[#allocation2 + $0x20] sm:$0xff]
        %v169 = vld [vmem:[#allocation2 + $0x28] sm:$0xff]
        %v170 = vld [vmem:[#allocation2 + $0x30] sm:$0xff]
        %v171 = vld [vmem:[#allocation2 + $0x38] sm:$0xff]
        %v172 = vld [vmem:[#allocation2 + $0x40] sm:$0xff]
        %v173 = vld [vmem:[#allocation2 + $0x48] sm:$0xff]
        %v174 = vld [vmem:[#allocation2 + $0x50] sm:$0xff]
        %v175 = vld [vmem:[#allocation2 + $0x58] sm:$0xff]
        %vm176 = vcmask 195584
        %v178 = vsel %vm176, %v160, 0
        %v181 = vsel %vm176, %v161, 0
        %v184 = vsel %vm176, %v162, 0
        %v187 = vsel %vm176, %v163, 0
        %v189 = vand.u32 %v165, 4294901760
        %190 = vmatprep.subr.mxu0 %v189
        %v191 = vand.u32 %v164, 4294901760
        %192 = vmatpush1.msra.mxu0 %v191
        %v193 = vand.u32 %v169, 4294901760
        %194 = vmatprep.subr.mxu0 %v193
        %v195 = vand.u32 %v168, 4294901760
        %196 = vmatpush1.msra.mxu0 %v195
        %v197 = vand.u32 %v173, 4294901760
        %198 = vmatprep.subr.mxu0 %v197
        %v199 = vand.u32 %v172, 4294901760
        %200 = vmatpush1.msra.mxu0 %v199
        %201 = vmatprep.subr.mxu0 0.0
        %202 = vmatpush1.msra.mxu0 0.0
        %203 = vmatprep.subr.mxu0 0.0
        %204 = vmatpush1.msra.mxu0 0.0
        %205 = vmatprep.subr.mxu0 0.0
        %206 = vmatpush1.msra.mxu0 0.0
        %207 = vmatprep.subr.mxu0 0.0
        %208 = vmatpush1.msra.mxu0 0.0
        %209 = vmatprep.subr.mxu0 0.0
        %210 = vmatpush1.msra.mxu0 0.0
        %211 = vmatprep.subr.mxu0 0.0
        %212 = vmatpush1.msra.mxu0 0.0
        %213 = vmatprep.subr.mxu0 0.0
        %214 = vmatpush1.msra.mxu0 0.0
        %215 = vmatprep.subr.mxu0 0.0
        %216 = vmatpush1.msra.mxu0 0.0
        %217 = vmatprep.subr.mxu0 0.0
        %218 = vmatpush1.msra.mxu0 0.0
        %219 = vmatprep.subr.mxu0 0.0
        %220 = vmatpush1.msra.mxu0 0.0
        %221 = vmatprep.subr.mxu0 0.0
        %222 = vmatpush1.msra.mxu0 0.0
        %223 = vmatprep.subr.mxu0 0.0
        %224 = vmatpush1.msra.mxu0 0.0
        %225 = vmatprep.subr.mxu0 0.0
        %226 = vmatpush1.msra.mxu0 0.0
        %227 = vmatprep.subr.mxu0 0.0
        %228 = vmatpush1.msra.mxu0 0.0
        %229 = vmatprep.subr.mxu0 0.0
        %230 = vmatpush1.msra.mxu0 0.0
        %231 = vmatprep.subr.mxu0 0.0
        %232 = vmatpush1.msra.mxu0 0.0
        %233 = vmatprep.subr.mxu0 0.0
        %234 = vmatpush1.msra.mxu0 0.0
        %235 = vmatprep.subr.mxu0 0.0
        %236 = vmatpush1.msra.mxu0 0.0
        %237 = vmatprep.subr.mxu0 0.0
        %238 = vmatpush1.msra.mxu0 0.0
        %239 = vmatprep.subr.mxu0 0.0
        %240 = vmatpush1.msra.mxu0 0.0
        %241 = vmatprep.subr.mxu0 0.0
        %242 = vmatpush1.msra.mxu0 0.0
        %243 = vmatprep.subr.mxu0 0.0
        %244 = vmatpush1.msra.mxu0 0.0
        %245 = vmatprep.subr.mxu0 0.0
        %246 = vmatpush1.msra.mxu0 0.0
        %247 = vmatprep.subr.mxu0 0.0
        %248 = vmatpush1.msra.mxu0 0.0
        %249 = vmatprep.subr.mxu0 0.0
        %250 = vmatpush1.msra.mxu0 0.0
        %251 = vmatprep.subr.mxu0 0.0
        %252 = vmatpush1.msra.mxu0 0.0
        %253 = vmatprep.subr.mxu0 0.0
        %254 = vmatpush1.msra.mxu0 0.0
        %255 = vmatprep.subr.mxu0 0.0
        %256 = vmatpush1.msra.mxu0 0.0
        %257 = vmatprep.subr.mxu0 0.0
        %258 = vmatpush1.msra.mxu0 0.0
        %259 = vmatprep.mubr.f32.mxu0 0.0
        %v260 = vand.u32 %v178, 4294901760
        %v261 = vsub.f32 %v178, %v260
        %v262 = vand.u32 %v261, 4294901760
        %v263 = vsub.f32 %v261, %v262
        %v264 = vand.u32 %v263, 4294901760
        %265 = vmatmul.mubr.f32.gmra.mrb[0].mxu0 %v264
        %v266 = vpop.f32.mrb[0].mxu0
        %v267 = vadd.f32 0.0, %v266
        %v268 = vpop.f32.mrb[0].mxu0
        %v269 = vadd.f32 0.0, %v268
        %270 = vmatprep.mubr.f32.mxu0 0.0
        %v271 = vand.u32 %v181, 4294901760
        %v272 = vsub.f32 %v181, %v271
        %v273 = vand.u32 %v272, 4294901760
        %v274 = vsub.f32 %v272, %v273
        %v275 = vand.u32 %v274, 4294901760
        %276 = vmatmul.mubr.f32.gmra.mrb[0].mxu0 %v275
        %v277 = vpop.f32.mrb[0].mxu0
        %v278 = vadd.f32 0.0, %v277
        %v279 = vpop.f32.mrb[0].mxu0
        %v280 = vadd.f32 0.0, %v279
        %281 = vmatprep.mubr.f32.mxu0 0.0
        %v282 = vand.u32 %v184, 4294901760
        %v283 = vsub.f32 %v184, %v282
        %v284 = vand.u32 %v283, 4294901760
        %v285 = vsub.f32 %v283, %v284
        %v286 = vand.u32 %v285, 4294901760
        %287 = vmatmul.mubr.f32.gmra.mrb[0].mxu0 %v286
        %v288 = vpop.f32.mrb[0].mxu0
        %v289 = vadd.f32 0.0, %v288
        %v290 = vpop.f32.mrb[0].mxu0
        %v291 = vadd.f32 0.0, %v290
        %292 = vmatprep.mubr.f32.mxu0 0.0
        %v293 = vand.u32 %v187, 4294901760
        %v294 = vsub.f32 %v187, %v293
        %v295 = vand.u32 %v294, 4294901760
        %v296 = vsub.f32 %v294, %v295
        %v297 = vand.u32 %v296, 4294901760
        %298 = vmatmul.mubr.f32.gmra.mrb[0].mxu0 %v297
        %v299 = vpop.f32.mrb[0].mxu0
        %v300 = vadd.f32 0.0, %v299
        %v301 = vpop.f32.mrb[0].mxu0
        %v302 = vadd.f32 0.0, %v301
        %303 = vdwg.mxu0
        %v304 = vand.u32 %v165, 4294901760
        %v305 = vsub.f32 %v165, %v304
        %v306 = vand.u32 %v305, 4294901760
        %v307 = vsub.f32 %v305, %v306
        %v308 = vand.u32 %v307, 4294901760
        %309 = vmatprep.subr.mxu0 %v308
        %v310 = vand.u32 %v164, 4294901760
        %v311 = vsub.f32 %v164, %v310
        %v312 = vand.u32 %v311, 4294901760
        %v313 = vsub.f32 %v311, %v312
        %v314 = vand.u32 %v313, 4294901760
        %315 = vmatpush1.msra.mxu0 %v314
        %v316 = vand.u32 %v169, 4294901760
        %v317 = vsub.f32 %v169, %v316
        %v318 = vand.u32 %v317, 4294901760
        %v319 = vsub.f32 %v317, %v318
        %v320 = vand.u32 %v319, 4294901760
        %321 = vmatprep.subr.mxu0 %v320
        %v322 = vand.u32 %v168, 4294901760
        %v323 = vsub.f32 %v168, %v322
        %v324 = vand.u32 %v323, 4294901760
        %v325 = vsub.f32 %v323, %v324
        %v326 = vand.u32 %v325, 4294901760
        %327 = vmatpush1.msra.mxu0 %v326
        %v328 = vand.u32 %v173, 4294901760
        %v329 = vsub.f32 %v173, %v328
        %v330 = vand.u32 %v329, 4294901760
        %v331 = vsub.f32 %v329, %v330
        %v332 = vand.u32 %v331, 4294901760
        %333 = vmatprep.subr.mxu0 %v332
        %v334 = vand.u32 %v172, 4294901760
        %v335 = vsub.f32 %v172, %v334
        %v336 = vand.u32 %v335, 4294901760
        %v337 = vsub.f32 %v335, %v336
        %v338 = vand.u32 %v337, 4294901760
        %339 = vmatpush1.msra.mxu0 %v338
        %340 = vmatprep.subr.mxu0 0.0
        %341 = vmatpush1.msra.mxu0 0.0
        %342 = vmatprep.subr.mxu0 0.0
        %343 = vmatpush1.msra.mxu0 0.0
        %344 = vmatprep.subr.mxu0 0.0
        %345 = vmatpush1.msra.mxu0 0.0
        %346 = vmatprep.subr.mxu0 0.0
        %347 = vmatpush1.msra.mxu0 0.0
        %348 = vmatprep.subr.mxu0 0.0
        %349 = vmatpush1.msra.mxu0 0.0
        %350 = vmatprep.subr.mxu0 0.0
        %351 = vmatpush1.msra.mxu0 0.0
        %352 = vmatprep.subr.mxu0 0.0
        %353 = vmatpush1.msra.mxu0 0.0
        %354 = vmatprep.subr.mxu0 0.0
        %355 = vmatpush1.msra.mxu0 0.0
        %356 = vmatprep.subr.mxu0 0.0
        %357 = vmatpush1.msra.mxu0 0.0
        %358 = vmatprep.subr.mxu0 0.0
        %359 = vmatpush1.msra.mxu0 0.0
        %360 = vmatprep.subr.mxu0 0.0
        %361 = vmatpush1.msra.mxu0 0.0
        %362 = vmatprep.subr.mxu0 0.0
        %363 = vmatpush1.msra.mxu0 0.0
        %364 = vmatprep.subr.mxu0 0.0
        %365 = vmatpush1.msra.mxu0 0.0
        %366 = vmatprep.subr.mxu0 0.0
        %367 = vmatpush1.msra.mxu0 0.0
        %368 = vmatprep.subr.mxu0 0.0
        %369 = vmatpush1.msra.mxu0 0.0
        %370 = vmatprep.subr.mxu0 0.0
        %371 = vmatpush1.msra.mxu0 0.0
        %372 = vmatprep.subr.mxu0 0.0
        %373 = vmatpush1.msra.mxu0 0.0
        %374 = vmatprep.subr.mxu0 0.0
        %375 = vmatpush1.msra.mxu0 0.0
        %376 = vmatprep.subr.mxu0 0.0
        %377 = vmatpush1.msra.mxu0 0.0
        %378 = vmatprep.subr.mxu0 0.0
        %379 = vmatpush1.msra.mxu0 0.0
        %380 = vmatprep.subr.mxu0 0.0
        %381 = vmatpush1.msra.mxu0 0.0
        %382 = vmatprep.subr.mxu0 0.0
        %383 = vmatpush1.msra.mxu0 0.0
        %384 = vmatprep.subr.mxu0 0.0
        %385 = vmatpush1.msra.mxu0 0.0
        %386 = vmatprep.subr.mxu0 0.0
        %387 = vmatpush1.msra.mxu0 0.0
        %388 = vmatprep.subr.mxu0 0.0
        %389 = vmatpush1.msra.mxu0 0.0
        %390 = vmatprep.subr.mxu0 0.0
        %391 = vmatpush1.msra.mxu0 0.0
        %392 = vmatprep.subr.mxu0 0.0
        %393 = vmatpush1.msra.mxu0 0.0
        %394 = vmatprep.subr.mxu0 0.0
        %395 = vmatpush1.msra.mxu0 0.0
        %396 = vmatprep.subr.mxu0 0.0
        %397 = vmatpush1.msra.mxu0 0.0
        %398 = vmatprep.mubr.f32.mxu0 0.0
        %v399 = vand.u32 %v178, 4294901760
        %400 = vmatmul.mubr.f32.gmra.mrb[0].mxu0 %v399
        %v401 = vpop.f32.mrb[0].mxu0
        %v402 = vadd.f32 %v267, %v401
        %v403 = vpop.f32.mrb[0].mxu0
        %v404 = vadd.f32 %v269, %v403
        %405 = vmatprep.mubr.f32.mxu0 0.0
        %v406 = vand.u32 %v181, 4294901760
        %407 = vmatmul.mubr.f32.gmra.mrb[0].mxu0 %v406
        %v408 = vpop.f32.mrb[0].mxu0
        %v409 = vadd.f32 %v278, %v408
        %v410 = vpop.f32.mrb[0].mxu0
        %v411 = vadd.f32 %v280, %v410
        %412 = vmatprep.mubr.f32.mxu0 0.0
        %v413 = vand.u32 %v184, 4294901760
        %414 = vmatmul.mubr.f32.gmra.mrb[0].mxu0 %v413
        %v415 = vpop.f32.mrb[0].mxu0
        %v416 = vadd.f32 %v289, %v415
        %v417 = vpop.f32.mrb[0].mxu0
        %v418 = vadd.f32 %v291, %v417
        %419 = vmatprep.mubr.f32.mxu0 0.0
        %v420 = vand.u32 %v187, 4294901760
        %421 = vmatmul.mubr.f32.gmra.mrb[0].mxu0 %v420
        %v422 = vpop.f32.mrb[0].mxu0
        %v423 = vadd.f32 %v300, %v422
        %v424 = vpop.f32.mrb[0].mxu0
        %v425 = vadd.f32 %v302, %v424
        %426 = vdwg.mxu0
        %v427 = vand.u32 %v165, 4294901760
        %v428 = vsub.f32 %v165, %v427
        %429 = vmatprep.subr.mxu0 %v428
        %v430 = vand.u32 %v164, 4294901760
        %v431 = vsub.f32 %v164, %v430
        %432 = vmatpush1.msra.mxu0 %v431
        %v433 = vand.u32 %v169, 4294901760
        %v434 = vsub.f32 %v169, %v433
        %435 = vmatprep.subr.mxu0 %v434
        %v436 = vand.u32 %v168, 4294901760
        %v437 = vsub.f32 %v168, %v436
        %438 = vmatpush1.msra.mxu0 %v437
        %v439 = vand.u32 %v173, 4294901760
        %v440 = vsub.f32 %v173, %v439
        %441 = vmatprep.subr.mxu0 %v440
        %v442 = vand.u32 %v172, 4294901760
        %v443 = vsub.f32 %v172, %v442
        %444 = vmatpush1.msra.mxu0 %v443
        %445 = vmatprep.subr.mxu0 0.0
        %446 = vmatpush1.msra.mxu0 0.0
        %447 = vmatprep.subr.mxu0 0.0
        %448 = vmatpush1.msra.mxu0 0.0
        %449 = vmatprep.subr.mxu0 0.0
        %450 = vmatpush1.msra.mxu0 0.0
        %451 = vmatprep.subr.mxu0 0.0
        %452 = vmatpush1.msra.mxu0 0.0
        %453 = vmatprep.subr.mxu0 0.0
        %454 = vmatpush1.msra.mxu0 0.0
        %455 = vmatprep.subr.mxu0 0.0
        %456 = vmatpush1.msra.mxu0 0.0
        %457 = vmatprep.subr.mxu0 0.0
        %458 = vmatpush1.msra.mxu0 0.0
        %459 = vmatprep.subr.mxu0 0.0
        %460 = vmatpush1.msra.mxu0 0.0
        %461 = vmatprep.subr.mxu0 0.0
        %462 = vmatpush1.msra.mxu0 0.0
        %463 = vmatprep.subr.mxu0 0.0
        %464 = vmatpush1.msra.mxu0 0.0
        %465 = vmatprep.subr.mxu0 0.0
        %466 = vmatpush1.msra.mxu0 0.0
        %467 = vmatprep.subr.mxu0 0.0
        %468 = vmatpush1.msra.mxu0 0.0
        %469 = vmatprep.subr.mxu0 0.0
        %470 = vmatpush1.msra.mxu0 0.0
        %471 = vmatprep.subr.mxu0 0.0
        %472 = vmatpush1.msra.mxu0 0.0
        %473 = vmatprep.subr.mxu0 0.0
        %474 = vmatpush1.msra.mxu0 0.0
        %475 = vmatprep.subr.mxu0 0.0
        %476 = vmatpush1.msra.mxu0 0.0
        %477 = vmatprep.subr.mxu0 0.0
        %478 = vmatpush1.msra.mxu0 0.0
        %479 = vmatprep.subr.mxu0 0.0
        %480 = vmatpush1.msra.mxu0 0.0
        %481 = vmatprep.subr.mxu0 0.0
        %482 = vmatpush1.msra.mxu0 0.0
        %483 = vmatprep.subr.mxu0 0.0
        %484 = vmatpush1.msra.mxu0 0.0
        %485 = vmatprep.subr.mxu0 0.0
        %486 = vmatpush1.msra.mxu0 0.0
        %487 = vmatprep.subr.mxu0 0.0
        %488 = vmatpush1.msra.mxu0 0.0
        %489 = vmatprep.subr.mxu0 0.0
        %490 = vmatpush1.msra.mxu0 0.0
        %491 = vmatprep.subr.mxu0 0.0
        %492 = vmatpush1.msra.mxu0 0.0
        %493 = vmatprep.subr.mxu0 0.0
        %494 = vmatpush1.msra.mxu0 0.0
        %495 = vmatprep.subr.mxu0 0.0
        %496 = vmatpush1.msra.mxu0 0.0
        %497 = vmatprep.subr.mxu0 0.0
        %498 = vmatpush1.msra.mxu0 0.0
        %499 = vmatprep.subr.mxu0 0.0
        %500 = vmatpush1.msra.mxu0 0.0
        %501 = vmatprep.subr.mxu0 0.0
        %502 = vmatpush1.msra.mxu0 0.0
        %503 = vmatprep.mubr.f32.mxu0 0.0
        %v504 = vand.u32 %v178, 4294901760
        %v505 = vsub.f32 %v178, %v504
        %506 = vmatmul.mubr.f32.gmra.mrb[0].mxu0 %v505
        %v507 = vpop.f32.mrb[0].mxu0
        %v508 = vadd.f32 %v402, %v507
        %v509 = vpop.f32.mrb[0].mxu0
        %v510 = vadd.f32 %v404, %v509
        %511 = vmatprep.mubr.f32.mxu0 0.0
        %v512 = vand.u32 %v181, 4294901760
        %v513 = vsub.f32 %v181, %v512
        %514 = vmatmul.mubr.f32.gmra.mrb[0].mxu0 %v513
        %v515 = vpop.f32.mrb[0].mxu0
        %v516 = vadd.f32 %v409, %v515
        %v517 = vpop.f32.mrb[0].mxu0
        %v518 = vadd.f32 %v411, %v517
        %519 = vmatprep.mubr.f32.mxu0 0.0
        %v520 = vand.u32 %v184, 4294901760
        %v521 = vsub.f32 %v184, %v520
        %522 = vmatmul.mubr.f32.gmra.mrb[0].mxu0 %v521
        %v523 = vpop.f32.mrb[0].mxu0
        %v524 = vadd.f32 %v416, %v523
        %v525 = vpop.f32.mrb[0].mxu0
        %v526 = vadd.f32 %v418, %v525
        %527 = vmatprep.mubr.f32.mxu0 0.0
        %v528 = vand.u32 %v187, 4294901760
        %v529 = vsub.f32 %v187, %v528
        %530 = vmatmul.mubr.f32.gmra.mrb[0].mxu0 %v529
        %v531 = vpop.f32.mrb[0].mxu0
        %v532 = vadd.f32 %v423, %v531
        %v533 = vpop.f32.mrb[0].mxu0
        %v534 = vadd.f32 %v425, %v533
        %535 = vdwg.mxu0
        %v536 = vand.u32 %v165, 4294901760
        %537 = vmatprep.subr.mxu0 %v536
        %v538 = vand.u32 %v164, 4294901760
        %539 = vmatpush1.msra.mxu0 %v538
        %v540 = vand.u32 %v169, 4294901760
        %541 = vmatprep.subr.mxu0 %v540
        %v542 = vand.u32 %v168, 4294901760
        %543 = vmatpush1.msra.mxu0 %v542
        %v544 = vand.u32 %v173, 4294901760
        %545 = vmatprep.subr.mxu0 %v544
        %v546 = vand.u32 %v172, 4294901760
        %547 = vmatpush1.msra.mxu0 %v546
        %548 = vmatprep.subr.mxu0 0.0
        %549 = vmatpush1.msra.mxu0 0.0
        %550 = vmatprep.subr.mxu0 0.0
        %551 = vmatpush1.msra.mxu0 0.0
        %552 = vmatprep.subr.mxu0 0.0
        %553 = vmatpush1.msra.mxu0 0.0
        %554 = vmatprep.subr.mxu0 0.0
        %555 = vmatpush1.msra.mxu0 0.0
        %556 = vmatprep.subr.mxu0 0.0
        %557 = vmatpush1.msra.mxu0 0.0
        %558 = vmatprep.subr.mxu0 0.0
        %559 = vmatpush1.msra.mxu0 0.0
        %560 = vmatprep.subr.mxu0 0.0
        %561 = vmatpush1.msra.mxu0 0.0
        %562 = vmatprep.subr.mxu0 0.0
        %563 = vmatpush1.msra.mxu0 0.0
        %564 = vmatprep.subr.mxu0 0.0
        %565 = vmatpush1.msra.mxu0 0.0
        %566 = vmatprep.subr.mxu0 0.0
        %567 = vmatpush1.msra.mxu0 0.0
        %568 = vmatprep.subr.mxu0 0.0
        %569 = vmatpush1.msra.mxu0 0.0
        %570 = vmatprep.subr.mxu0 0.0
        %571 = vmatpush1.msra.mxu0 0.0
        %572 = vmatprep.subr.mxu0 0.0
        %573 = vmatpush1.msra.mxu0 0.0
        %574 = vmatprep.subr.mxu0 0.0
        %575 = vmatpush1.msra.mxu0 0.0
        %576 = vmatprep.subr.mxu0 0.0
        %577 = vmatpush1.msra.mxu0 0.0
        %578 = vmatprep.subr.mxu0 0.0
        %579 = vmatpush1.msra.mxu0 0.0
        %580 = vmatprep.subr.mxu0 0.0
        %581 = vmatpush1.msra.mxu0 0.0
        %582 = vmatprep.subr.mxu0 0.0
        %583 = vmatpush1.msra.mxu0 0.0
        %584 = vmatprep.subr.mxu0 0.0
        %585 = vmatpush1.msra.mxu0 0.0
        %586 = vmatprep.subr.mxu0 0.0
        %587 = vmatpush1.msra.mxu0 0.0
        %588 = vmatprep.subr.mxu0 0.0
        %589 = vmatpush1.msra.mxu0 0.0
        %590 = vmatprep.subr.mxu0 0.0
        %591 = vmatpush1.msra.mxu0 0.0
        %592 = vmatprep.subr.mxu0 0.0
        %593 = vmatpush1.msra.mxu0 0.0
        %594 = vmatprep.subr.mxu0 0.0
        %595 = vmatpush1.msra.mxu0 0.0
        %596 = vmatprep.subr.mxu0 0.0
        %597 = vmatpush1.msra.mxu0 0.0
        %598 = vmatprep.subr.mxu0 0.0
        %599 = vmatpush1.msra.mxu0 0.0
        %600 = vmatprep.subr.mxu0 0.0
        %601 = vmatpush1.msra.mxu0 0.0
        %602 = vmatprep.subr.mxu0 0.0
        %603 = vmatpush1.msra.mxu0 0.0
        %604 = vmatprep.subr.mxu0 0.0
        %605 = vmatpush1.msra.mxu0 0.0
        %606 = vmatprep.mubr.f32.mxu0 0.0
        %v607 = vand.u32 %v178, 4294901760
        %v608 = vsub.f32 %v178, %v607
        %v609 = vand.u32 %v608, 4294901760
        %610 = vmatmul.mubr.f32.gmra.mrb[0].mxu0 %v609
        %v611 = vpop.f32.mrb[0].mxu0
        %v612 = vadd.f32 %v508, %v611
        %v613 = vpop.f32.mrb[0].mxu0
        %v614 = vadd.f32 %v510, %v613
        %615 = vmatprep.mubr.f32.mxu0 0.0
        %v616 = vand.u32 %v181, 4294901760
        %v617 = vsub.f32 %v181, %v616
        %v618 = vand.u32 %v617, 4294901760
        %619 = vmatmul.mubr.f32.gmra.mrb[0].mxu0 %v618
        %v620 = vpop.f32.mrb[0].mxu0
        %v621 = vadd.f32 %v516, %v620
        %v622 = vpop.f32.mrb[0].mxu0
        %v623 = vadd.f32 %v518, %v622
        %624 = vmatprep.mubr.f32.mxu0 0.0
        %v625 = vand.u32 %v184, 4294901760
        %v626 = vsub.f32 %v184, %v625
        %v627 = vand.u32 %v626, 4294901760
        %628 = vmatmul.mubr.f32.gmra.mrb[0].mxu0 %v627
        %v629 = vpop.f32.mrb[0].mxu0
        %v630 = vadd.f32 %v524, %v629
        %v631 = vpop.f32.mrb[0].mxu0
        %v632 = vadd.f32 %v526, %v631
        %633 = vmatprep.mubr.f32.mxu0 0.0
        %v634 = vand.u32 %v187, 4294901760
        %v635 = vsub.f32 %v187, %v634
        %v636 = vand.u32 %v635, 4294901760
        %637 = vmatmul.mubr.f32.gmra.mrb[0].mxu0 %v636
        %v638 = vpop.f32.mrb[0].mxu0
        %v639 = vadd.f32 %v532, %v638
        %v640 = vpop.f32.mrb[0].mxu0
        %v641 = vadd.f32 %v534, %v640
        %642 = vdwg.mxu0
        %v643 = vand.u32 %v165, 4294901760
        %v644 = vsub.f32 %v165, %v643
        %v645 = vand.u32 %v644, 4294901760
        %646 = vmatprep.subr.mxu0 %v645
        %v647 = vand.u32 %v164, 4294901760
        %v648 = vsub.f32 %v164, %v647
        %v649 = vand.u32 %v648, 4294901760
        %650 = vmatpush1.msra.mxu0 %v649
        %v651 = vand.u32 %v169, 4294901760
        %v652 = vsub.f32 %v169, %v651
        %v653 = vand.u32 %v652, 4294901760
        %654 = vmatprep.subr.mxu0 %v653
        %v655 = vand.u32 %v168, 4294901760
        %v656 = vsub.f32 %v168, %v655
        %v657 = vand.u32 %v656, 4294901760
        %658 = vmatpush1.msra.mxu0 %v657
        %v659 = vand.u32 %v173, 4294901760
        %v660 = vsub.f32 %v173, %v659
        %v661 = vand.u32 %v660, 4294901760
        %662 = vmatprep.subr.mxu0 %v661
        %v663 = vand.u32 %v172, 4294901760
        %v664 = vsub.f32 %v172, %v663
        %v665 = vand.u32 %v664, 4294901760
        %666 = vmatpush1.msra.mxu0 %v665
        %667 = vmatprep.subr.mxu0 0.0
        %668 = vmatpush1.msra.mxu0 0.0
        %669 = vmatprep.subr.mxu0 0.0
        %670 = vmatpush1.msra.mxu0 0.0
        %671 = vmatprep.subr.mxu0 0.0
        %672 = vmatpush1.msra.mxu0 0.0
        %673 = vmatprep.subr.mxu0 0.0
        %674 = vmatpush1.msra.mxu0 0.0
        %675 = vmatprep.subr.mxu0 0.0
        %676 = vmatpush1.msra.mxu0 0.0
        %677 = vmatprep.subr.mxu0 0.0
        %678 = vmatpush1.msra.mxu0 0.0
        %679 = vmatprep.subr.mxu0 0.0
        %680 = vmatpush1.msra.mxu0 0.0
        %681 = vmatprep.subr.mxu0 0.0
        %682 = vmatpush1.msra.mxu0 0.0
        %683 = vmatprep.subr.mxu0 0.0
        %684 = vmatpush1.msra.mxu0 0.0
        %685 = vmatprep.subr.mxu0 0.0
        %686 = vmatpush1.msra.mxu0 0.0
        %687 = vmatprep.subr.mxu0 0.0
        %688 = vmatpush1.msra.mxu0 0.0
        %689 = vmatprep.subr.mxu0 0.0
        %690 = vmatpush1.msra.mxu0 0.0
        %691 = vmatprep.subr.mxu0 0.0
        %692 = vmatpush1.msra.mxu0 0.0
        %693 = vmatprep.subr.mxu0 0.0
        %694 = vmatpush1.msra.mxu0 0.0
        %695 = vmatprep.subr.mxu0 0.0
        %696 = vmatpush1.msra.mxu0 0.0
        %697 = vmatprep.subr.mxu0 0.0
        %698 = vmatpush1.msra.mxu0 0.0
        %699 = vmatprep.subr.mxu0 0.0
        %700 = vmatpush1.msra.mxu0 0.0
        %701 = vmatprep.subr.mxu0 0.0
        %702 = vmatpush1.msra.mxu0 0.0
        %703 = vmatprep.subr.mxu0 0.0
        %704 = vmatpush1.msra.mxu0 0.0
        %705 = vmatprep.subr.mxu0 0.0
        %706 = vmatpush1.msra.mxu0 0.0
        %707 = vmatprep.subr.mxu0 0.0
        %708 = vmatpush1.msra.mxu0 0.0
        %709 = vmatprep.subr.mxu0 0.0
        %710 = vmatpush1.msra.mxu0 0.0
        %711 = vmatprep.subr.mxu0 0.0
        %712 = vmatpush1.msra.mxu0 0.0
        %713 = vmatprep.subr.mxu0 0.0
        %714 = vmatpush1.msra.mxu0 0.0
        %715 = vmatprep.subr.mxu0 0.0
        %716 = vmatpush1.msra.mxu0 0.0
        %717 = vmatprep.subr.mxu0 0.0
        %718 = vmatpush1.msra.mxu0 0.0
        %719 = vmatprep.subr.mxu0 0.0
        %720 = vmatpush1.msra.mxu0 0.0
        %721 = vmatprep.subr.mxu0 0.0
        %722 = vmatpush1.msra.mxu0 0.0
        %723 = vmatprep.subr.mxu0 0.0
        %724 = vmatpush1.msra.mxu0 0.0
        %725 = vmatprep.mubr.f32.mxu0 0.0
        %v726 = vand.u32 %v178, 4294901760
        %727 = vmatmul.mubr.f32.gmra.mrb[0].mxu0 %v726
        %v728 = vpop.f32.mrb[0].mxu0
        %v729 = vadd.f32 %v612, %v728
        %v730 = vpop.f32.mrb[0].mxu0
        %v731 = vadd.f32 %v614, %v730
        %732 = vmatprep.mubr.f32.mxu0 0.0
        %v733 = vand.u32 %v181, 4294901760
        %734 = vmatmul.mubr.f32.gmra.mrb[0].mxu0 %v733
        %v735 = vpop.f32.mrb[0].mxu0
        %v736 = vadd.f32 %v621, %v735
        %v737 = vpop.f32.mrb[0].mxu0
        %v738 = vadd.f32 %v623, %v737
        %739 = vmatprep.mubr.f32.mxu0 0.0
        %v740 = vand.u32 %v184, 4294901760
        %741 = vmatmul.mubr.f32.gmra.mrb[0].mxu0 %v740
        %v742 = vpop.f32.mrb[0].mxu0
        %v743 = vadd.f32 %v630, %v742
        %v744 = vpop.f32.mrb[0].mxu0
        %v745 = vadd.f32 %v632, %v744
        %746 = vmatprep.mubr.f32.mxu0 0.0
        %v747 = vand.u32 %v187, 4294901760
        %748 = vmatmul.mubr.f32.gmra.mrb[0].mxu0 %v747
        %v749 = vpop.f32.mrb[0].mxu0
        %v750 = vadd.f32 %v639, %v749
        %v751 = vpop.f32.mrb[0].mxu0
        %v752 = vadd.f32 %v641, %v751
        %753 = vdwg.mxu0
        %v754 = vand.u32 %v165, 4294901760
        %755 = vmatprep.subr.mxu0 %v754
        %v756 = vand.u32 %v164, 4294901760
        %757 = vmatpush1.msra.mxu0 %v756
        %v758 = vand.u32 %v169, 4294901760
        %759 = vmatprep.subr.mxu0 %v758
        %v760 = vand.u32 %v168, 4294901760
        %761 = vmatpush1.msra.mxu0 %v760
        %v762 = vand.u32 %v173, 4294901760
        %763 = vmatprep.subr.mxu0 %v762
        %v764 = vand.u32 %v172, 4294901760
        %765 = vmatpush1.msra.mxu0 %v764
        %766 = vmatprep.subr.mxu0 0.0
        %767 = vmatpush1.msra.mxu0 0.0
        %768 = vmatprep.subr.mxu0 0.0
        %769 = vmatpush1.msra.mxu0 0.0
        %770 = vmatprep.subr.mxu0 0.0
        %771 = vmatpush1.msra.mxu0 0.0
        %772 = vmatprep.subr.mxu0 0.0
        %773 = vmatpush1.msra.mxu0 0.0
        %774 = vmatprep.subr.mxu0 0.0
        %775 = vmatpush1.msra.mxu0 0.0
        %776 = vmatprep.subr.mxu0 0.0
        %777 = vmatpush1.msra.mxu0 0.0
        %778 = vmatprep.subr.mxu0 0.0
        %779 = vmatpush1.msra.mxu0 0.0
        %780 = vmatprep.subr.mxu0 0.0
        %781 = vmatpush1.msra.mxu0 0.0
        %782 = vmatprep.subr.mxu0 0.0
        %783 = vmatpush1.msra.mxu0 0.0
        %784 = vmatprep.subr.mxu0 0.0
        %785 = vmatpush1.msra.mxu0 0.0
        %786 = vmatprep.subr.mxu0 0.0
        %787 = vmatpush1.msra.mxu0 0.0
        %788 = vmatprep.subr.mxu0 0.0
        %789 = vmatpush1.msra.mxu0 0.0
        %790 = vmatprep.subr.mxu0 0.0
        %791 = vmatpush1.msra.mxu0 0.0
        %792 = vmatprep.subr.mxu0 0.0
        %793 = vmatpush1.msra.mxu0 0.0
        %794 = vmatprep.subr.mxu0 0.0
        %795 = vmatpush1.msra.mxu0 0.0
        %796 = vmatprep.subr.mxu0 0.0
        %797 = vmatpush1.msra.mxu0 0.0
        %798 = vmatprep.subr.mxu0 0.0
        %799 = vmatpush1.msra.mxu0 0.0
        %800 = vmatprep.subr.mxu0 0.0
        %801 = vmatpush1.msra.mxu0 0.0
        %802 = vmatprep.subr.mxu0 0.0
        %803 = vmatpush1.msra.mxu0 0.0
        %804 = vmatprep.subr.mxu0 0.0
        %805 = vmatpush1.msra.mxu0 0.0
        %806 = vmatprep.subr.mxu0 0.0
        %807 = vmatpush1.msra.mxu0 0.0
        %808 = vmatprep.subr.mxu0 0.0
        %809 = vmatpush1.msra.mxu0 0.0
        %810 = vmatprep.subr.mxu0 0.0
        %811 = vmatpush1.msra.mxu0 0.0
        %812 = vmatprep.subr.mxu0 0.0
        %813 = vmatpush1.msra.mxu0 0.0
        %814 = vmatprep.subr.mxu0 0.0
        %815 = vmatpush1.msra.mxu0 0.0
        %816 = vmatprep.subr.mxu0 0.0
        %817 = vmatpush1.msra.mxu0 0.0
        %818 = vmatprep.subr.mxu0 0.0
        %819 = vmatpush1.msra.mxu0 0.0
        %820 = vmatprep.subr.mxu0 0.0
        %821 = vmatpush1.msra.mxu0 0.0
        %822 = vmatprep.subr.mxu0 0.0
        %823 = vmatpush1.msra.mxu0 0.0
        %824 = vmatprep.mubr.f32.mxu0 0.0
        %v825 = vand.u32 %v178, 4294901760
        %826 = vmatmul.mubr.f32.gmra.mrb[0].mxu0 %v825
        %v827 = vpop.f32.mrb[0].mxu0
        %v828 = vadd.f32 %v729, %v827
        %v829 = vpop.f32.mrb[0].mxu0
        %v830 = vadd.f32 %v731, %v829
        %831 = vmatprep.mubr.f32.mxu0 0.0
        %v832 = vand.u32 %v181, 4294901760
        %833 = vmatmul.mubr.f32.gmra.mrb[0].mxu0 %v832
        %v834 = vpop.f32.mrb[0].mxu0
        %v835 = vadd.f32 %v736, %v834
        %v836 = vpop.f32.mrb[0].mxu0
        %v837 = vadd.f32 %v738, %v836
        %838 = vmatprep.mubr.f32.mxu0 0.0
        %v839 = vand.u32 %v184, 4294901760
        %840 = vmatmul.mubr.f32.gmra.mrb[0].mxu0 %v839
        %v841 = vpop.f32.mrb[0].mxu0
        %v842 = vadd.f32 %v743, %v841
        %v843 = vpop.f32.mrb[0].mxu0
        %v844 = vadd.f32 %v745, %v843
        %845 = vmatprep.mubr.f32.mxu0 0.0
        %v846 = vand.u32 %v187, 4294901760
        %847 = vmatmul.mubr.f32.gmra.mrb[0].mxu0 %v846
        %v848 = vpop.f32.mrb[0].mxu0
        %v849 = vadd.f32 %v750, %v848
        %v850 = vpop.f32.mrb[0].mxu0
        %v851 = vadd.f32 %v752, %v850
        %852 = vdwg.mxu0
        %v853 = vand.u32 %v167, 4294901760
        %854 = vmatprep.subr.mxu0 %v853
        %v855 = vand.u32 %v166, 4294901760
        %856 = vmatpush1.msra.mxu0 %v855
        %v857 = vand.u32 %v171, 4294901760
        %858 = vmatprep.subr.mxu0 %v857
        %v859 = vand.u32 %v170, 4294901760
        %860 = vmatpush1.msra.mxu0 %v859
        %v861 = vand.u32 %v175, 4294901760
        %862 = vmatprep.subr.mxu0 %v861
        %v863 = vand.u32 %v174, 4294901760
        %864 = vmatpush1.msra.mxu0 %v863
        %865 = vmatprep.subr.mxu0 0.0
        %866 = vmatpush1.msra.mxu0 0.0
        %867 = vmatprep.subr.mxu0 0.0
        %868 = vmatpush1.msra.mxu0 0.0
        %869 = vmatprep.subr.mxu0 0.0
        %870 = vmatpush1.msra.mxu0 0.0
        %871 = vmatprep.subr.mxu0 0.0
        %872 = vmatpush1.msra.mxu0 0.0
        %873 = vmatprep.subr.mxu0 0.0
        %874 = vmatpush1.msra.mxu0 0.0
        %875 = vmatprep.subr.mxu0 0.0
        %876 = vmatpush1.msra.mxu0 0.0
        %877 = vmatprep.subr.mxu0 0.0
        %878 = vmatpush1.msra.mxu0 0.0
        %879 = vmatprep.subr.mxu0 0.0
        %880 = vmatpush1.msra.mxu0 0.0
        %881 = vmatprep.subr.mxu0 0.0
        %882 = vmatpush1.msra.mxu0 0.0
        %883 = vmatprep.subr.mxu0 0.0
        %884 = vmatpush1.msra.mxu0 0.0
        %885 = vmatprep.subr.mxu0 0.0
        %886 = vmatpush1.msra.mxu0 0.0
        %887 = vmatprep.subr.mxu0 0.0
        %888 = vmatpush1.msra.mxu0 0.0
        %889 = vmatprep.subr.mxu0 0.0
        %890 = vmatpush1.msra.mxu0 0.0
        %891 = vmatprep.subr.mxu0 0.0
        %892 = vmatpush1.msra.mxu0 0.0
        %893 = vmatprep.subr.mxu0 0.0
        %894 = vmatpush1.msra.mxu0 0.0
        %895 = vmatprep.subr.mxu0 0.0
        %896 = vmatpush1.msra.mxu0 0.0
        %897 = vmatprep.subr.mxu0 0.0
        %898 = vmatpush1.msra.mxu0 0.0
        %899 = vmatprep.subr.mxu0 0.0
        %900 = vmatpush1.msra.mxu0 0.0
        %901 = vmatprep.subr.mxu0 0.0
        %902 = vmatpush1.msra.mxu0 0.0
        %903 = vmatprep.subr.mxu0 0.0
        %904 = vmatpush1.msra.mxu0 0.0
        %905 = vmatprep.subr.mxu0 0.0
        %906 = vmatpush1.msra.mxu0 0.0
        %907 = vmatprep.subr.mxu0 0.0
        %908 = vmatpush1.msra.mxu0 0.0
        %909 = vmatprep.subr.mxu0 0.0
        %910 = vmatpush1.msra.mxu0 0.0
        %911 = vmatprep.subr.mxu0 0.0
        %912 = vmatpush1.msra.mxu0 0.0
        %913 = vmatprep.subr.mxu0 0.0
        %914 = vmatpush1.msra.mxu0 0.0
        %915 = vmatprep.subr.mxu0 0.0
        %916 = vmatpush1.msra.mxu0 0.0
        %917 = vmatprep.subr.mxu0 0.0
        %918 = vmatpush1.msra.mxu0 0.0
        %919 = vmatprep.subr.mxu0 0.0
        %920 = vmatpush1.msra.mxu0 0.0
        %921 = vmatprep.subr.mxu0 0.0
        %922 = vmatpush1.msra.mxu0 0.0
        %923 = vmatprep.mubr.f32.mxu0 0.0
        %v924 = vand.u32 %v178, 4294901760
        %v925 = vsub.f32 %v178, %v924
        %v926 = vand.u32 %v925, 4294901760
        %v927 = vsub.f32 %v925, %v926
        %v928 = vand.u32 %v927, 4294901760
        %929 = vmatmul.mubr.f32.gmra.mrb[0].mxu0 %v928
        %v930 = vpop.f32.mrb[0].mxu0
        %v931 = vadd.f32 0.0, %v930
        %v932 = vpop.f32.mrb[0].mxu0
        %v933 = vadd.f32 0.0, %v932
        %934 = vmatprep.mubr.f32.mxu0 0.0
        %v935 = vand.u32 %v181, 4294901760
        %v936 = vsub.f32 %v181, %v935
        %v937 = vand.u32 %v936, 4294901760
        %v938 = vsub.f32 %v936, %v937
        %v939 = vand.u32 %v938, 4294901760
        %940 = vmatmul.mubr.f32.gmra.mrb[0].mxu0 %v939
        %v941 = vpop.f32.mrb[0].mxu0
        %v942 = vadd.f32 0.0, %v941
        %v943 = vpop.f32.mrb[0].mxu0
        %v944 = vadd.f32 0.0, %v943
        %945 = vmatprep.mubr.f32.mxu0 0.0
        %v946 = vand.u32 %v184, 4294901760
        %v947 = vsub.f32 %v184, %v946
        %v948 = vand.u32 %v947, 4294901760
        %v949 = vsub.f32 %v947, %v948
        %v950 = vand.u32 %v949, 4294901760
        %951 = vmatmul.mubr.f32.gmra.mrb[0].mxu0 %v950
        %v952 = vpop.f32.mrb[0].mxu0
        %v953 = vadd.f32 0.0, %v952
        %v954 = vpop.f32.mrb[0].mxu0
        %v955 = vadd.f32 0.0, %v954
        %956 = vmatprep.mubr.f32.mxu0 0.0
        %v957 = vand.u32 %v187, 4294901760
        %v958 = vsub.f32 %v187, %v957
        %v959 = vand.u32 %v958, 4294901760
        %v960 = vsub.f32 %v958, %v959
        %v961 = vand.u32 %v960, 4294901760
        %962 = vmatmul.mubr.f32.gmra.mrb[0].mxu0 %v961
        %v963 = vpop.f32.mrb[0].mxu0
        %v964 = vadd.f32 0.0, %v963
        %v965 = vpop.f32.mrb[0].mxu0
        %v966 = vadd.f32 0.0, %v965
        %967 = vdwg.mxu0
        %v968 = vand.u32 %v167, 4294901760
        %v969 = vsub.f32 %v167, %v968
        %v970 = vand.u32 %v969, 4294901760
        %v971 = vsub.f32 %v969, %v970
        %v972 = vand.u32 %v971, 4294901760
        %973 = vmatprep.subr.mxu0 %v972
        %v974 = vand.u32 %v166, 4294901760
        %v975 = vsub.f32 %v166, %v974
        %v976 = vand.u32 %v975, 4294901760
        %v977 = vsub.f32 %v975, %v976
        %v978 = vand.u32 %v977, 4294901760
        %979 = vmatpush1.msra.mxu0 %v978
        %v980 = vand.u32 %v171, 4294901760
        %v981 = vsub.f32 %v171, %v980
        %v982 = vand.u32 %v981, 4294901760
        %v983 = vsub.f32 %v981, %v982
        %v984 = vand.u32 %v983, 4294901760
        %985 = vmatprep.subr.mxu0 %v984
        %v986 = vand.u32 %v170, 4294901760
        %v987 = vsub.f32 %v170, %v986
        %v988 = vand.u32 %v987, 4294901760
        %v989 = vsub.f32 %v987, %v988
        %v990 = vand.u32 %v989, 4294901760
        %991 = vmatpush1.msra.mxu0 %v990
        %v992 = vand.u32 %v175, 4294901760
        %v993 = vsub.f32 %v175, %v992
        %v994 = vand.u32 %v993, 4294901760
        %v995 = vsub.f32 %v993, %v994
        %v996 = vand.u32 %v995, 4294901760
        %997 = vmatprep.subr.mxu0 %v996
        %v998 = vand.u32 %v174, 4294901760
        %v999 = vsub.f32 %v174, %v998
        %v1000 = vand.u32 %v999, 4294901760
        %v1001 = vsub.f32 %v999, %v1000
        %v1002 = vand.u32 %v1001, 4294901760
        %1003 = vmatpush1.msra.mxu0 %v1002
        %1004 = vmatprep.subr.mxu0 0.0
        %1005 = vmatpush1.msra.mxu0 0.0
        %1006 = vmatprep.subr.mxu0 0.0
        %1007 = vmatpush1.msra.mxu0 0.0
        %1008 = vmatprep.subr.mxu0 0.0
        %1009 = vmatpush1.msra.mxu0 0.0
        %1010 = vmatprep.subr.mxu0 0.0
        %1011 = vmatpush1.msra.mxu0 0.0
        %1012 = vmatprep.subr.mxu0 0.0
        %1013 = vmatpush1.msra.mxu0 0.0
        %1014 = vmatprep.subr.mxu0 0.0
        %1015 = vmatpush1.msra.mxu0 0.0
        %1016 = vmatprep.subr.mxu0 0.0
        %1017 = vmatpush1.msra.mxu0 0.0
        %1018 = vmatprep.subr.mxu0 0.0
        %1019 = vmatpush1.msra.mxu0 0.0
        %1020 = vmatprep.subr.mxu0 0.0
        %1021 = vmatpush1.msra.mxu0 0.0
        %1022 = vmatprep.subr.mxu0 0.0
        %1023 = vmatpush1.msra.mxu0 0.0
        %1024 = vmatprep.subr.mxu0 0.0
        %1025 = vmatpush1.msra.mxu0 0.0
        %1026 = vmatprep.subr.mxu0 0.0
        %1027 = vmatpush1.msra.mxu0 0.0
        %1028 = vmatprep.subr.mxu0 0.0
        %1029 = vmatpush1.msra.mxu0 0.0
        %1030 = vmatprep.subr.mxu0 0.0
        %1031 = vmatpush1.msra.mxu0 0.0
        %1032 = vmatprep.subr.mxu0 0.0
        %1033 = vmatpush1.msra.mxu0 0.0
        %1034 = vmatprep.subr.mxu0 0.0
        %1035 = vmatpush1.msra.mxu0 0.0
        %1036 = vmatprep.subr.mxu0 0.0
        %1037 = vmatpush1.msra.mxu0 0.0
        %1038 = vmatprep.subr.mxu0 0.0
        %1039 = vmatpush1.msra.mxu0 0.0
        %1040 = vmatprep.subr.mxu0 0.0
        %1041 = vmatpush1.msra.mxu0 0.0
        %1042 = vmatprep.subr.mxu0 0.0
        %1043 = vmatpush1.msra.mxu0 0.0
        %1044 = vmatprep.subr.mxu0 0.0
        %1045 = vmatpush1.msra.mxu0 0.0
        %1046 = vmatprep.subr.mxu0 0.0
        %1047 = vmatpush1.msra.mxu0 0.0
        %1048 = vmatprep.subr.mxu0 0.0
        %1049 = vmatpush1.msra.mxu0 0.0
        %1050 = vmatprep.subr.mxu0 0.0
        %1051 = vmatpush1.msra.mxu0 0.0
        %1052 = vmatprep.subr.mxu0 0.0
        %1053 = vmatpush1.msra.mxu0 0.0
        %1054 = vmatprep.subr.mxu0 0.0
        %1055 = vmatpush1.msra.mxu0 0.0
        %1056 = vmatprep.subr.mxu0 0.0
        %1057 = vmatpush1.msra.mxu0 0.0
        %1058 = vmatprep.subr.mxu0 0.0
        %1059 = vmatpush1.msra.mxu0 0.0
        %1060 = vmatprep.subr.mxu0 0.0
        %1061 = vmatpush1.msra.mxu0 0.0
        %1062 = vmatprep.mubr.f32.mxu0 0.0
        %v1063 = vand.u32 %v178, 4294901760
        %1064 = vmatmul.mubr.f32.gmra.mrb[0].mxu0 %v1063
        %v1065 = vpop.f32.mrb[0].mxu0
        %v1066 = vadd.f32 %v931, %v1065
        %v1067 = vpop.f32.mrb[0].mxu0
        %v1068 = vadd.f32 %v933, %v1067
        %1069 = vmatprep.mubr.f32.mxu0 0.0
        %v1070 = vand.u32 %v181, 4294901760
        %1071 = vmatmul.mubr.f32.gmra.mrb[0].mxu0 %v1070
        %v1072 = vpop.f32.mrb[0].mxu0
        %v1073 = vadd.f32 %v942, %v1072
        %v1074 = vpop.f32.mrb[0].mxu0
        %v1075 = vadd.f32 %v944, %v1074
        %1076 = vmatprep.mubr.f32.mxu0 0.0
        %v1077 = vand.u32 %v184, 4294901760
        %1078 = vmatmul.mubr.f32.gmra.mrb[0].mxu0 %v1077
        %v1079 = vpop.f32.mrb[0].mxu0
        %v1080 = vadd.f32 %v953, %v1079
        %v1081 = vpop.f32.mrb[0].mxu0
        %v1082 = vadd.f32 %v955, %v1081
        %1083 = vmatprep.mubr.f32.mxu0 0.0
        %v1084 = vand.u32 %v187, 4294901760
        %1085 = vmatmul.mubr.f32.gmra.mrb[0].mxu0 %v1084
        %v1086 = vpop.f32.mrb[0].mxu0
        %v1087 = vadd.f32 %v964, %v1086
        %v1088 = vpop.f32.mrb[0].mxu0
        %v1089 = vadd.f32 %v966, %v1088
        %1090 = vdwg.mxu0
        %v1091 = vand.u32 %v167, 4294901760
        %v1092 = vsub.f32 %v167, %v1091
        %1093 = vmatprep.subr.mxu0 %v1092
        %v1094 = vand.u32 %v166, 4294901760
        %v1095 = vsub.f32 %v166, %v1094
        %1096 = vmatpush1.msra.mxu0 %v1095
        %v1097 = vand.u32 %v171, 4294901760
        %v1098 = vsub.f32 %v171, %v1097
        %1099 = vmatprep.subr.mxu0 %v1098
        %v1100 = vand.u32 %v170, 4294901760
        %v1101 = vsub.f32 %v170, %v1100
        %1102 = vmatpush1.msra.mxu0 %v1101
        %v1103 = vand.u32 %v175, 4294901760
        %v1104 = vsub.f32 %v175, %v1103
        %1105 = vmatprep.subr.mxu0 %v1104
        %v1106 = vand.u32 %v174, 4294901760
        %v1107 = vsub.f32 %v174, %v1106
        %1108 = vmatpush1.msra.mxu0 %v1107
        %1109 = vmatprep.subr.mxu0 0.0
        %1110 = vmatpush1.msra.mxu0 0.0
        %1111 = vmatprep.subr.mxu0 0.0
        %1112 = vmatpush1.msra.mxu0 0.0
        %1113 = vmatprep.subr.mxu0 0.0
        %1114 = vmatpush1.msra.mxu0 0.0
        %1115 = vmatprep.subr.mxu0 0.0
        %1116 = vmatpush1.msra.mxu0 0.0
        %1117 = vmatprep.subr.mxu0 0.0
        %1118 = vmatpush1.msra.mxu0 0.0
        %1119 = vmatprep.subr.mxu0 0.0
        %1120 = vmatpush1.msra.mxu0 0.0
        %1121 = vmatprep.subr.mxu0 0.0
        %1122 = vmatpush1.msra.mxu0 0.0
        %1123 = vmatprep.subr.mxu0 0.0
        %1124 = vmatpush1.msra.mxu0 0.0
        %1125 = vmatprep.subr.mxu0 0.0
        %1126 = vmatpush1.msra.mxu0 0.0
        %1127 = vmatprep.subr.mxu0 0.0
        %1128 = vmatpush1.msra.mxu0 0.0
        %1129 = vmatprep.subr.mxu0 0.0
        %1130 = vmatpush1.msra.mxu0 0.0
        %1131 = vmatprep.subr.mxu0 0.0
        %1132 = vmatpush1.msra.mxu0 0.0
        %1133 = vmatprep.subr.mxu0 0.0
        %1134 = vmatpush1.msra.mxu0 0.0
        %1135 = vmatprep.subr.mxu0 0.0
        %1136 = vmatpush1.msra.mxu0 0.0
        %1137 = vmatprep.subr.mxu0 0.0
        %1138 = vmatpush1.msra.mxu0 0.0
        %1139 = vmatprep.subr.mxu0 0.0
        %1140 = vmatpush1.msra.mxu0 0.0
        %1141 = vmatprep.subr.mxu0 0.0
        %1142 = vmatpush1.msra.mxu0 0.0
        %1143 = vmatprep.subr.mxu0 0.0
        %1144 = vmatpush1.msra.mxu0 0.0
        %1145 = vmatprep.subr.mxu0 0.0
        %1146 = vmatpush1.msra.mxu0 0.0
        %1147 = vmatprep.subr.mxu0 0.0
        %1148 = vmatpush1.msra.mxu0 0.0
        %1149 = vmatprep.subr.mxu0 0.0
        %1150 = vmatpush1.msra.mxu0 0.0
        %1151 = vmatprep.subr.mxu0 0.0
        %1152 = vmatpush1.msra.mxu0 0.0
        %1153 = vmatprep.subr.mxu0 0.0
        %1154 = vmatpush1.msra.mxu0 0.0
        %1155 = vmatprep.subr.mxu0 0.0
        %1156 = vmatpush1.msra.mxu0 0.0
        %1157 = vmatprep.subr.mxu0 0.0
        %1158 = vmatpush1.msra.mxu0 0.0
        %1159 = vmatprep.subr.mxu0 0.0
        %1160 = vmatpush1.msra.mxu0 0.0
        %1161 = vmatprep.subr.mxu0 0.0
        %1162 = vmatpush1.msra.mxu0 0.0
        %1163 = vmatprep.subr.mxu0 0.0
        %1164 = vmatpush1.msra.mxu0 0.0
        %1165 = vmatprep.subr.mxu0 0.0
        %1166 = vmatpush1.msra.mxu0 0.0
        %1167 = vmatprep.mubr.f32.mxu0 0.0
        %v1168 = vand.u32 %v178, 4294901760
        %v1169 = vsub.f32 %v178, %v1168
        %1170 = vmatmul.mubr.f32.gmra.mrb[0].mxu0 %v1169
        %v1171 = vpop.f32.mrb[0].mxu0
        %v1172 = vadd.f32 %v1066, %v1171
        %v1173 = vpop.f32.mrb[0].mxu0
        %v1174 = vadd.f32 %v1068, %v1173
        %1175 = vmatprep.mubr.f32.mxu0 0.0
        %v1176 = vand.u32 %v181, 4294901760
        %v1177 = vsub.f32 %v181, %v1176
        %1178 = vmatmul.mubr.f32.gmra.mrb[0].mxu0 %v1177
        %v1179 = vpop.f32.mrb[0].mxu0
        %v1180 = vadd.f32 %v1073, %v1179
        %v1181 = vpop.f32.mrb[0].mxu0
        %v1182 = vadd.f32 %v1075, %v1181
        %1183 = vmatprep.mubr.f32.mxu0 0.0
        %v1184 = vand.u32 %v184, 4294901760
        %v1185 = vsub.f32 %v184, %v1184
        %1186 = vmatmul.mubr.f32.gmra.mrb[0].mxu0 %v1185
        %v1187 = vpop.f32.mrb[0].mxu0
        %v1188 = vadd.f32 %v1080, %v1187
        %v1189 = vpop.f32.mrb[0].mxu0
        %v1190 = vadd.f32 %v1082, %v1189
        %1191 = vmatprep.mubr.f32.mxu0 0.0
        %v1192 = vand.u32 %v187, 4294901760
        %v1193 = vsub.f32 %v187, %v1192
        %1194 = vmatmul.mubr.f32.gmra.mrb[0].mxu0 %v1193
        %v1195 = vpop.f32.mrb[0].mxu0
        %v1196 = vadd.f32 %v1087, %v1195
        %v1197 = vpop.f32.mrb[0].mxu0
        %v1198 = vadd.f32 %v1089, %v1197
        %1199 = vdwg.mxu0
        %v1200 = vand.u32 %v167, 4294901760
        %1201 = vmatprep.subr.mxu0 %v1200
        %v1202 = vand.u32 %v166, 4294901760
        %1203 = vmatpush1.msra.mxu0 %v1202
        %v1204 = vand.u32 %v171, 4294901760
        %1205 = vmatprep.subr.mxu0 %v1204
        %v1206 = vand.u32 %v170, 4294901760
        %1207 = vmatpush1.msra.mxu0 %v1206
        %v1208 = vand.u32 %v175, 4294901760
        %1209 = vmatprep.subr.mxu0 %v1208
        %v1210 = vand.u32 %v174, 4294901760
        %1211 = vmatpush1.msra.mxu0 %v1210
        %1212 = vmatprep.subr.mxu0 0.0
        %1213 = vmatpush1.msra.mxu0 0.0
        %1214 = vmatprep.subr.mxu0 0.0
        %1215 = vmatpush1.msra.mxu0 0.0
        %1216 = vmatprep.subr.mxu0 0.0
        %1217 = vmatpush1.msra.mxu0 0.0
        %1218 = vmatprep.subr.mxu0 0.0
        %1219 = vmatpush1.msra.mxu0 0.0
        %1220 = vmatprep.subr.mxu0 0.0
        %1221 = vmatpush1.msra.mxu0 0.0
        %1222 = vmatprep.subr.mxu0 0.0
        %1223 = vmatpush1.msra.mxu0 0.0
        %1224 = vmatprep.subr.mxu0 0.0
        %1225 = vmatpush1.msra.mxu0 0.0
        %1226 = vmatprep.subr.mxu0 0.0
        %1227 = vmatpush1.msra.mxu0 0.0
        %1228 = vmatprep.subr.mxu0 0.0
        %1229 = vmatpush1.msra.mxu0 0.0
        %1230 = vmatprep.subr.mxu0 0.0
        %1231 = vmatpush1.msra.mxu0 0.0
        %1232 = vmatprep.subr.mxu0 0.0
        %1233 = vmatpush1.msra.mxu0 0.0
        %1234 = vmatprep.subr.mxu0 0.0
        %1235 = vmatpush1.msra.mxu0 0.0
        %1236 = vmatprep.subr.mxu0 0.0
        %1237 = vmatpush1.msra.mxu0 0.0
        %1238 = vmatprep.subr.mxu0 0.0
        %1239 = vmatpush1.msra.mxu0 0.0
        %1240 = vmatprep.subr.mxu0 0.0
        %1241 = vmatpush1.msra.mxu0 0.0
        %1242 = vmatprep.subr.mxu0 0.0
        %1243 = vmatpush1.msra.mxu0 0.0
        %1244 = vmatprep.subr.mxu0 0.0
        %1245 = vmatpush1.msra.mxu0 0.0
        %1246 = vmatprep.subr.mxu0 0.0
        %1247 = vmatpush1.msra.mxu0 0.0
        %1248 = vmatprep.subr.mxu0 0.0
        %1249 = vmatpush1.msra.mxu0 0.0
        %1250 = vmatprep.subr.mxu0 0.0
        %1251 = vmatpush1.msra.mxu0 0.0
        %1252 = vmatprep.subr.mxu0 0.0
        %1253 = vmatpush1.msra.mxu0 0.0
        %1254 = vmatprep.subr.mxu0 0.0
        %1255 = vmatpush1.msra.mxu0 0.0
        %1256 = vmatprep.subr.mxu0 0.0
        %1257 = vmatpush1.msra.mxu0 0.0
        %1258 = vmatprep.subr.mxu0 0.0
        %1259 = vmatpush1.msra.mxu0 0.0
        %1260 = vmatprep.subr.mxu0 0.0
        %1261 = vmatpush1.msra.mxu0 0.0
        %1262 = vmatprep.subr.mxu0 0.0
        %1263 = vmatpush1.msra.mxu0 0.0
        %1264 = vmatprep.subr.mxu0 0.0
        %1265 = vmatpush1.msra.mxu0 0.0
        %1266 = vmatprep.subr.mxu0 0.0
        %1267 = vmatpush1.msra.mxu0 0.0
        %1268 = vmatprep.subr.mxu0 0.0
        %1269 = vmatpush1.msra.mxu0 0.0
        %1270 = vmatprep.mubr.f32.mxu0 0.0
        %v1271 = vand.u32 %v178, 4294901760
        %v1272 = vsub.f32 %v178, %v1271
        %v1273 = vand.u32 %v1272, 4294901760
        %1274 = vmatmul.mubr.f32.gmra.mrb[0].mxu0 %v1273
        %v1275 = vpop.f32.mrb[0].mxu0
        %v1276 = vadd.f32 %v1172, %v1275
        %v1277 = vpop.f32.mrb[0].mxu0
        %v1278 = vadd.f32 %v1174, %v1277
        %1279 = vmatprep.mubr.f32.mxu0 0.0
        %v1280 = vand.u32 %v181, 4294901760
        %v1281 = vsub.f32 %v181, %v1280
        %v1282 = vand.u32 %v1281, 4294901760
        %1283 = vmatmul.mubr.f32.gmra.mrb[0].mxu0 %v1282
        %v1284 = vpop.f32.mrb[0].mxu0
        %v1285 = vadd.f32 %v1180, %v1284
        %v1286 = vpop.f32.mrb[0].mxu0
        %v1287 = vadd.f32 %v1182, %v1286
        %1288 = vmatprep.mubr.f32.mxu0 0.0
        %v1289 = vand.u32 %v184, 4294901760
        %v1290 = vsub.f32 %v184, %v1289
        %v1291 = vand.u32 %v1290, 4294901760
        %1292 = vmatmul.mubr.f32.gmra.mrb[0].mxu0 %v1291
        %v1293 = vpop.f32.mrb[0].mxu0
        %v1294 = vadd.f32 %v1188, %v1293
        %v1295 = vpop.f32.mrb[0].mxu0
        %v1296 = vadd.f32 %v1190, %v1295
        %1297 = vmatprep.mubr.f32.mxu0 0.0
        %v1298 = vand.u32 %v187, 4294901760
        %v1299 = vsub.f32 %v187, %v1298
        %v1300 = vand.u32 %v1299, 4294901760
        %1301 = vmatmul.mubr.f32.gmra.mrb[0].mxu0 %v1300
        %v1302 = vpop.f32.mrb[0].mxu0
        %v1303 = vadd.f32 %v1196, %v1302
        %v1304 = vpop.f32.mrb[0].mxu0
        %v1305 = vadd.f32 %v1198, %v1304
        %1306 = vdwg.mxu0
        %v1307 = vand.u32 %v167, 4294901760
        %v1308 = vsub.f32 %v167, %v1307
        %v1309 = vand.u32 %v1308, 4294901760
        %1310 = vmatprep.subr.mxu0 %v1309
        %v1311 = vand.u32 %v166, 4294901760
        %v1312 = vsub.f32 %v166, %v1311
        %v1313 = vand.u32 %v1312, 4294901760
        %1314 = vmatpush1.msra.mxu0 %v1313
        %v1315 = vand.u32 %v171, 4294901760
        %v1316 = vsub.f32 %v171, %v1315
        %v1317 = vand.u32 %v1316, 4294901760
        %1318 = vmatprep.subr.mxu0 %v1317
        %v1319 = vand.u32 %v170, 4294901760
        %v1320 = vsub.f32 %v170, %v1319
        %v1321 = vand.u32 %v1320, 4294901760
        %1322 = vmatpush1.msra.mxu0 %v1321
        %v1323 = vand.u32 %v175, 4294901760
        %v1324 = vsub.f32 %v175, %v1323
        %v1325 = vand.u32 %v1324, 4294901760
        %1326 = vmatprep.subr.mxu0 %v1325
        %v1327 = vand.u32 %v174, 4294901760
        %v1328 = vsub.f32 %v174, %v1327
        %v1329 = vand.u32 %v1328, 4294901760
        %1330 = vmatpush1.msra.mxu0 %v1329
        %1331 = vmatprep.subr.mxu0 0.0
        %1332 = vmatpush1.msra.mxu0 0.0
        %1333 = vmatprep.subr.mxu0 0.0
        %1334 = vmatpush1.msra.mxu0 0.0
        %1335 = vmatprep.subr.mxu0 0.0
        %1336 = vmatpush1.msra.mxu0 0.0
        %1337 = vmatprep.subr.mxu0 0.0
        %1338 = vmatpush1.msra.mxu0 0.0
        %1339 = vmatprep.subr.mxu0 0.0
        %1340 = vmatpush1.msra.mxu0 0.0
        %1341 = vmatprep.subr.mxu0 0.0
        %1342 = vmatpush1.msra.mxu0 0.0
        %1343 = vmatprep.subr.mxu0 0.0
        %1344 = vmatpush1.msra.mxu0 0.0
        %1345 = vmatprep.subr.mxu0 0.0
        %1346 = vmatpush1.msra.mxu0 0.0
        %1347 = vmatprep.subr.mxu0 0.0
        %1348 = vmatpush1.msra.mxu0 0.0
        %1349 = vmatprep.subr.mxu0 0.0
        %1350 = vmatpush1.msra.mxu0 0.0
        %1351 = vmatprep.subr.mxu0 0.0
        %1352 = vmatpush1.msra.mxu0 0.0
        %1353 = vmatprep.subr.mxu0 0.0
        %1354 = vmatpush1.msra.mxu0 0.0
        %1355 = vmatprep.subr.mxu0 0.0
        %1356 = vmatpush1.msra.mxu0 0.0
        %1357 = vmatprep.subr.mxu0 0.0
        %1358 = vmatpush1.msra.mxu0 0.0
        %1359 = vmatprep.subr.mxu0 0.0
        %1360 = vmatpush1.msra.mxu0 0.0
        %1361 = vmatprep.subr.mxu0 0.0
        %1362 = vmatpush1.msra.mxu0 0.0
        %1363 = vmatprep.subr.mxu0 0.0
        %1364 = vmatpush1.msra.mxu0 0.0
        %1365 = vmatprep.subr.mxu0 0.0
        %1366 = vmatpush1.msra.mxu0 0.0
        %1367 = vmatprep.subr.mxu0 0.0
        %1368 = vmatpush1.msra.mxu0 0.0
        %1369 = vmatprep.subr.mxu0 0.0
        %1370 = vmatpush1.msra.mxu0 0.0
        %1371 = vmatprep.subr.mxu0 0.0
        %1372 = vmatpush1.msra.mxu0 0.0
        %1373 = vmatprep.subr.mxu0 0.0
        %1374 = vmatpush1.msra.mxu0 0.0
        %1375 = vmatprep.subr.mxu0 0.0
        %1376 = vmatpush1.msra.mxu0 0.0
        %1377 = vmatprep.subr.mxu0 0.0
        %1378 = vmatpush1.msra.mxu0 0.0
        %1379 = vmatprep.subr.mxu0 0.0
        %1380 = vmatpush1.msra.mxu0 0.0
        %1381 = vmatprep.subr.mxu0 0.0
        %1382 = vmatpush1.msra.mxu0 0.0
        %1383 = vmatprep.subr.mxu0 0.0
        %1384 = vmatpush1.msra.mxu0 0.0
        %1385 = vmatprep.subr.mxu0 0.0
        %1386 = vmatpush1.msra.mxu0 0.0
        %1387 = vmatprep.subr.mxu0 0.0
        %1388 = vmatpush1.msra.mxu0 0.0
        %1389 = vmatprep.mubr.f32.mxu0 0.0
        %v1390 = vand.u32 %v178, 4294901760
        %1391 = vmatmul.mubr.f32.gmra.mrb[0].mxu0 %v1390
        %v1392 = vpop.f32.mrb[0].mxu0
        %v1393 = vadd.f32 %v1276, %v1392
        %v1394 = vpop.f32.mrb[0].mxu0
        %v1395 = vadd.f32 %v1278, %v1394
        %1396 = vmatprep.mubr.f32.mxu0 0.0
        %v1397 = vand.u32 %v181, 4294901760
        %1398 = vmatmul.mubr.f32.gmra.mrb[0].mxu0 %v1397
        %v1399 = vpop.f32.mrb[0].mxu0
        %v1400 = vadd.f32 %v1285, %v1399
        %v1401 = vpop.f32.mrb[0].mxu0
        %v1402 = vadd.f32 %v1287, %v1401
        %1403 = vmatprep.mubr.f32.mxu0 0.0
        %v1404 = vand.u32 %v184, 4294901760
        %1405 = vmatmul.mubr.f32.gmra.mrb[0].mxu0 %v1404
        %v1406 = vpop.f32.mrb[0].mxu0
        %v1407 = vadd.f32 %v1294, %v1406
        %v1408 = vpop.f32.mrb[0].mxu0
        %v1409 = vadd.f32 %v1296, %v1408
        %1410 = vmatprep.mubr.f32.mxu0 0.0
        %v1411 = vand.u32 %v187, 4294901760
        %1412 = vmatmul.mubr.f32.gmra.mrb[0].mxu0 %v1411
        %v1413 = vpop.f32.mrb[0].mxu0
        %v1414 = vadd.f32 %v1303, %v1413
        %v1415 = vpop.f32.mrb[0].mxu0
        %v1416 = vadd.f32 %v1305, %v1415
        %1417 = vdwg.mxu0
        %v1418 = vand.u32 %v167, 4294901760
        %1419 = vmatprep.subr.mxu0 %v1418
        %v1420 = vand.u32 %v166, 4294901760
        %1421 = vmatpush1.msra.mxu0 %v1420
        %v1422 = vand.u32 %v171, 4294901760
        %1423 = vmatprep.subr.mxu0 %v1422
        %v1424 = vand.u32 %v170, 4294901760
        %1425 = vmatpush1.msra.mxu0 %v1424
        %v1426 = vand.u32 %v175, 4294901760
        %1427 = vmatprep.subr.mxu0 %v1426
        %v1428 = vand.u32 %v174, 4294901760
        %1429 = vmatpush1.msra.mxu0 %v1428
        %1430 = vmatprep.subr.mxu0 0.0
        %1431 = vmatpush1.msra.mxu0 0.0
        %1432 = vmatprep.subr.mxu0 0.0
        %1433 = vmatpush1.msra.mxu0 0.0
        %1434 = vmatprep.subr.mxu0 0.0
        %1435 = vmatpush1.msra.mxu0 0.0
        %1436 = vmatprep.subr.mxu0 0.0
        %1437 = vmatpush1.msra.mxu0 0.0
        %1438 = vmatprep.subr.mxu0 0.0
        %1439 = vmatpush1.msra.mxu0 0.0
        %1440 = vmatprep.subr.mxu0 0.0
        %1441 = vmatpush1.msra.mxu0 0.0
        %1442 = vmatprep.subr.mxu0 0.0
        %1443 = vmatpush1.msra.mxu0 0.0
        %1444 = vmatprep.subr.mxu0 0.0
        %1445 = vmatpush1.msra.mxu0 0.0
        %1446 = vmatprep.subr.mxu0 0.0
        %1447 = vmatpush1.msra.mxu0 0.0
        %1448 = vmatprep.subr.mxu0 0.0
        %1449 = vmatpush1.msra.mxu0 0.0
        %1450 = vmatprep.subr.mxu0 0.0
        %1451 = vmatpush1.msra.mxu0 0.0
        %1452 = vmatprep.subr.mxu0 0.0
        %1453 = vmatpush1.msra.mxu0 0.0
        %1454 = vmatprep.subr.mxu0 0.0
        %1455 = vmatpush1.msra.mxu0 0.0
        %1456 = vmatprep.subr.mxu0 0.0
        %1457 = vmatpush1.msra.mxu0 0.0
        %1458 = vmatprep.subr.mxu0 0.0
        %1459 = vmatpush1.msra.mxu0 0.0
        %1460 = vmatprep.subr.mxu0 0.0
        %1461 = vmatpush1.msra.mxu0 0.0
        %1462 = vmatprep.subr.mxu0 0.0
        %1463 = vmatpush1.msra.mxu0 0.0
        %1464 = vmatprep.subr.mxu0 0.0
        %1465 = vmatpush1.msra.mxu0 0.0
        %1466 = vmatprep.subr.mxu0 0.0
        %1467 = vmatpush1.msra.mxu0 0.0
        %1468 = vmatprep.subr.mxu0 0.0
        %1469 = vmatpush1.msra.mxu0 0.0
        %1470 = vmatprep.subr.mxu0 0.0
        %1471 = vmatpush1.msra.mxu0 0.0
        %1472 = vmatprep.subr.mxu0 0.0
        %1473 = vmatpush1.msra.mxu0 0.0
        %1474 = vmatprep.subr.mxu0 0.0
        %1475 = vmatpush1.msra.mxu0 0.0
        %1476 = vmatprep.subr.mxu0 0.0
        %1477 = vmatpush1.msra.mxu0 0.0
        %1478 = vmatprep.subr.mxu0 0.0
        %1479 = vmatpush1.msra.mxu0 0.0
        %1480 = vmatprep.subr.mxu0 0.0
        %1481 = vmatpush1.msra.mxu0 0.0
        %1482 = vmatprep.subr.mxu0 0.0
        %1483 = vmatpush1.msra.mxu0 0.0
        %1484 = vmatprep.subr.mxu0 0.0
        %1485 = vmatpush1.msra.mxu0 0.0
        %1486 = vmatprep.subr.mxu0 0.0
        %1487 = vmatpush1.msra.mxu0 0.0
        %1488 = vmatprep.mubr.f32.mxu0 0.0
        %v1489 = vand.u32 %v178, 4294901760
        %1490 = vmatmul.mubr.f32.gmra.mrb[0].mxu0 %v1489
        %v1491 = vpop.f32.mrb[0].mxu0
        %v1492 = vadd.f32 %v1393, %v1491
        %v1493 = vpop.f32.mrb[0].mxu0
        %v1494 = vadd.f32 %v1395, %v1493
        %1495 = vmatprep.mubr.f32.mxu0 0.0
        %v1496 = vand.u32 %v181, 4294901760
        %1497 = vmatmul.mubr.f32.gmra.mrb[0].mxu0 %v1496
        %v1498 = vpop.f32.mrb[0].mxu0
        %v1499 = vadd.f32 %v1400, %v1498
        %v1500 = vpop.f32.mrb[0].mxu0
        %v1501 = vadd.f32 %v1402, %v1500
        %1502 = vmatprep.mubr.f32.mxu0 0.0
        %v1503 = vand.u32 %v184, 4294901760
        %1504 = vmatmul.mubr.f32.gmra.mrb[0].mxu0 %v1503
        %v1505 = vpop.f32.mrb[0].mxu0
        %v1506 = vadd.f32 %v1407, %v1505
        %v1507 = vpop.f32.mrb[0].mxu0
        %v1508 = vadd.f32 %v1409, %v1507
        %1509 = vmatprep.mubr.f32.mxu0 0.0
        %v1510 = vand.u32 %v187, 4294901760
        %1511 = vmatmul.mubr.f32.gmra.mrb[0].mxu0 %v1510
        %v1512 = vpop.f32.mrb[0].mxu0
        %v1513 = vadd.f32 %v1414, %v1512
        %v1514 = vpop.f32.mrb[0].mxu0
        %v1515 = vadd.f32 %v1416, %v1514
        %1516 = vdwg.mxu0
        %v1517 = vand.u32 2147483647, %v828
        %vm1518 = vcmp.le.f32.partialorder %v1517, 0.7853982
        %vm1519 = vcmp.lt.s32.totalorder %v828, 0
        %v1520 = vand.u32 %v828, 2139095040
        %v1521 = vshrl.u32 %v1520, 23
        %v1522 = vsub.s32 %v1521, 127
        %v1523 = vand.u32 2147483647, %v828
        %v1524 = vand.u32 %v1523, 8388607
        %v1525 = vor.u32 %v1524, 8388608
        %v1526 = vsub.s32 0, %v1525
        %v1527 = vadd.s32 %v1522, 1
        %vm1528 = vcmp.gt.s32.totalorder %v1527, 0
        %v1529 = vsel %vm1528, %v1527, 0
        %v1530 = vshrl.u32 %v1529, 5
        %v1531 = vand.u32 %v1529, 31
        %v1532 = vsub.s32 32, %v1531
        %v1533 = vshrl.u32 683565275, %v1532
        %v1534 = vshll.u32 683565275, %v1531
        %v1535 = vshrl.u32 2475754826, %v1532
        %v1536 = vor.u32 %v1534, %v1535
        %v1537 = vshll.u32 2475754826, %v1531
        %v1538 = vshrl.u32 2131351028, %v1532
        %v1539 = vor.u32 %v1537, %v1538
        %v1540 = vshll.u32 2131351028, %v1531
        %v1541 = vshrl.u32 2102212464, %v1532
        %v1542 = vor.u32 %v1540, %v1541
        %v1543 = vshll.u32 2102212464, %v1531
        %v1544 = vshrl.u32 920167782, %v1532
        %v1545 = vor.u32 %v1543, %v1544
        %v1546 = vshll.u32 920167782, %v1531
        %v1547 = vshrl.u32 1326507024, %v1532
        %v1548 = vor.u32 %v1546, %v1547
        %vm1549 = vcmp.lt.s32.totalorder %v1530, 1
        %vm1550 = vcmp.lt.s32.totalorder %v1530, 2
        %vm1551 = vcmp.lt.s32.totalorder %v1530, 3
        %vm1552 = vcmp.lt.s32.totalorder %v1530, 4
        %v1553 = vsel %vm1549, %v1533, %v1536
        %v1554 = vsel %vm1552, %v1542, 2102212464
        %v1555 = vsel %vm1551, %v1539, %v1554
        %v1556 = vsel %vm1550, %v1553, %v1555
        %v1557 = vsel %vm1549, %v1536, %v1539
        %v1558 = vsel %vm1552, %v1545, 920167782
        %v1559 = vsel %vm1551, %v1542, %v1558
        %v1560 = vsel %vm1550, %v1557, %v1559
        %v1561 = vsel %vm1549, %v1539, %v1542
        %v1562 = vsel %vm1552, %v1548, 1326507024
        %v1563 = vsel %vm1551, %v1545, %v1562
        %v1564 = vsel %vm1550, %v1561, %v1563
        %v1565 = vshll.u32 %v1525, 8
        %v1566 = vmul.u32.u64.compose %v1565, %v1564
        %v1567 = vextract.low.u32 %v1566
        %v1568 = vextract.high.u32 %v1566
        %v1569 = vmul.u32.u64.compose %v1565, %v1560
        %v1570 = vextract.low.u32 %v1569
        %v1571 = vextract.high.u32 %v1569
        %v1572 = vmul.u32 %v1565, %v1556
        %v1573 = vadd.s32 %v1568, %v1570
        %vm1574 = vc.u32 %v1568, %v1570
        %v1575 = vadd.s32 %v1571, 1
        %v1576 = vsel %vm1574, %v1575, %v1571
        %v1577 = vadd.s32 %v1572, %v1576
        %v1578 = vadd.s32 %v1577, 536870912
        %v1579 = vshrl.u32 %v1578, 30
        %v1580 = vshll.u32 %v1579, 30
        %v1581 = vsub.s32 %v1577, %v1580
        %vm1582 = vcmp.lt.s32.totalorder %v1581, 0
        %v1583 = vsub.s32 0, %v1581
        %v1584 = vsel %vm1582, %v1583, %v1581
        %v1585 = vclz %v1584
        %v1586 = vsub.s32 %v1585, 2
        %vm1587 = vcmp.gt.s32.totalorder 0, %v1586
        %v1588 = vsel %vm1587, 0, %v1586
        %v1589 = vsub.s32 32, %v1588
        %v1590 = vshll.u32 %v1581, %v1588
        %v1591 = vshrl.u32 %v1573, %v1589
        %v1592 = vor.u32 %v1590, %v1591
        %v1593 = vsub.s32 4294967266, %v1588
        %v1594 = vadd.s32 %v1593, 127
        %v1595 = vshll.u32 %v1594, 23
        %v1596 = vor.u32 4788187, %v1595
        %v1597 = vand.u32 2147483647, %v1596
        %v1599 = vcvt.s32.f32 %v1592
        %v1600 = vmul.f32 %v1599, %v1597
        %v1601 = vxor.u32 %v1600, 2147483648
        %v1602 = vsel %vm1519, %v1601, %v1600
        %v1603 = vsub.s32 4, %v1579
        %v1604 = vsel %vm1519, %v1603, %v1579
        %v1605 = vsel %vm1518, %v828, %v1602
        %v1606 = vsel %vm1518, 0, %v1604
        %v1607 = vcosq.f32.pop %v1605
        %v1608 = vsinq.f32.pop %v1605
        %vm1609 = vweird.f32 %v828
        %v1610 = vadd.s32 %v1606, 3
        %v1611 = vand.u32 %v1610, 3
        %vm1612 = vcmp.lt.s32.totalorder %v1611, 2
        %vm1613 = vcmp.eq.s32.totalorder %v1611, 0
        %v1614 = vxor.u32 %v1608, 2147483648
        %v1615 = vsel %vm1613, %v1607, %v1614
        %vm1616 = vcmp.eq.s32.totalorder %v1611, 2
        %v1617 = vxor.u32 %v1607, 2147483648
        %v1618 = vsel %vm1616, %v1617, %v1608
        %v1619 = vsel %vm1612, %v1615, %v1618
        %v1620 = vsel %vm1609, nan, %v1619
        %v1621 = vand.u32 2147483647, %v830
        %vm1622 = vcmp.le.f32.partialorder %v1621, 0.7853982
        %vm1623 = vcmp.lt.s32.totalorder %v830, 0
        %v1624 = vand.u32 %v830, 2139095040
        %v1625 = vshrl.u32 %v1624, 23
        %v1626 = vsub.s32 %v1625, 127
        %v1627 = vand.u32 2147483647, %v830
        %v1628 = vand.u32 %v1627, 8388607
        %v1629 = vor.u32 %v1628, 8388608
        %v1630 = vsub.s32 0, %v1629
        %v1631 = vadd.s32 %v1626, 1
        %vm1632 = vcmp.gt.s32.totalorder %v1631, 0
        %v1633 = vsel %vm1632, %v1631, 0
        %v1634 = vshrl.u32 %v1633, 5
        %v1635 = vand.u32 %v1633, 31
        %v1636 = vsub.s32 32, %v1635
        %v1637 = vshrl.u32 683565275, %v1636
        %v1638 = vshll.u32 683565275, %v1635
        %v1639 = vshrl.u32 2475754826, %v1636
        %v1640 = vor.u32 %v1638, %v1639
        %v1641 = vshll.u32 2475754826, %v1635
        %v1642 = vshrl.u32 2131351028, %v1636
        %v1643 = vor.u32 %v1641, %v1642
        %v1644 = vshll.u32 2131351028, %v1635
        %v1645 = vshrl.u32 2102212464, %v1636
        %v1646 = vor.u32 %v1644, %v1645
        %v1647 = vshll.u32 2102212464, %v1635
        %v1648 = vshrl.u32 920167782, %v1636
        %v1649 = vor.u32 %v1647, %v1648
        %v1650 = vshll.u32 920167782, %v1635
        %v1651 = vshrl.u32 1326507024, %v1636
        %v1652 = vor.u32 %v1650, %v1651
        %vm1653 = vcmp.lt.s32.totalorder %v1634, 1
        %vm1654 = vcmp.lt.s32.totalorder %v1634, 2
        %vm1655 = vcmp.lt.s32.totalorder %v1634, 3
        %vm1656 = vcmp.lt.s32.totalorder %v1634, 4
        %v1657 = vsel %vm1653, %v1637, %v1640
        %v1658 = vsel %vm1656, %v1646, 2102212464
        %v1659 = vsel %vm1655, %v1643, %v1658
        %v1660 = vsel %vm1654, %v1657, %v1659
        %v1661 = vsel %vm1653, %v1640, %v1643
        %v1662 = vsel %vm1656, %v1649, 920167782
        %v1663 = vsel %vm1655, %v1646, %v1662
        %v1664 = vsel %vm1654, %v1661, %v1663
        %v1665 = vsel %vm1653, %v1643, %v1646
        %v1666 = vsel %vm1656, %v1652, 1326507024
        %v1667 = vsel %vm1655, %v1649, %v1666
        %v1668 = vsel %vm1654, %v1665, %v1667
        %v1669 = vshll.u32 %v1629, 8
        %v1670 = vmul.u32.u64.compose %v1669, %v1668
        %v1671 = vextract.low.u32 %v1670
        %v1672 = vextract.high.u32 %v1670
        %v1673 = vmul.u32.u64.compose %v1669, %v1664
        %v1674 = vextract.low.u32 %v1673
        %v1675 = vextract.high.u32 %v1673
        %v1676 = vmul.u32 %v1669, %v1660
        %v1677 = vadd.s32 %v1672, %v1674
        %vm1678 = vc.u32 %v1672, %v1674
        %v1679 = vadd.s32 %v1675, 1
        %v1680 = vsel %vm1678, %v1679, %v1675
        %v1681 = vadd.s32 %v1676, %v1680
        %v1682 = vadd.s32 %v1681, 536870912
        %v1683 = vshrl.u32 %v1682, 30
        %v1684 = vshll.u32 %v1683, 30
        %v1685 = vsub.s32 %v1681, %v1684
        %vm1686 = vcmp.lt.s32.totalorder %v1685, 0
        %v1687 = vsub.s32 0, %v1685
        %v1688 = vsel %vm1686, %v1687, %v1685
        %v1689 = vclz %v1688
        %v1690 = vsub.s32 %v1689, 2
        %vm1691 = vcmp.gt.s32.totalorder 0, %v1690
        %v1692 = vsel %vm1691, 0, %v1690
        %v1693 = vsub.s32 32, %v1692
        %v1694 = vshll.u32 %v1685, %v1692
        %v1695 = vshrl.u32 %v1677, %v1693
        %v1696 = vor.u32 %v1694, %v1695
        %v1697 = vsub.s32 4294967266, %v1692
        %v1698 = vadd.s32 %v1697, 127
        %v1699 = vshll.u32 %v1698, 23
        %v1700 = vor.u32 4788187, %v1699
        %v1701 = vand.u32 2147483647, %v1700
        %v1703 = vcvt.s32.f32 %v1696
        %v1704 = vmul.f32 %v1703, %v1701
        %v1705 = vxor.u32 %v1704, 2147483648
        %v1706 = vsel %vm1623, %v1705, %v1704
        %v1707 = vsub.s32 4, %v1683
        %v1708 = vsel %vm1623, %v1707, %v1683
        %v1709 = vsel %vm1622, %v830, %v1706
        %v1710 = vsel %vm1622, 0, %v1708
        %v1711 = vcosq.f32.pop %v1709
        %v1712 = vsinq.f32.pop %v1709
        %vm1713 = vweird.f32 %v830
        %v1714 = vadd.s32 %v1710, 3
        %v1715 = vand.u32 %v1714, 3
        %vm1716 = vcmp.lt.s32.totalorder %v1715, 2
        %vm1717 = vcmp.eq.s32.totalorder %v1715, 0
        %v1718 = vxor.u32 %v1712, 2147483648
        %v1719 = vsel %vm1717, %v1711, %v1718
        %vm1720 = vcmp.eq.s32.totalorder %v1715, 2
        %v1721 = vxor.u32 %v1711, 2147483648
        %v1722 = vsel %vm1720, %v1721, %v1712
        %v1723 = vsel %vm1716, %v1719, %v1722
        %v1724 = vsel %vm1713, nan, %v1723
        %v1725 = vand.u32 2147483647, %v1492
        %vm1726 = vcmp.le.f32.partialorder %v1725, 0.7853982
        %vm1727 = vcmp.lt.s32.totalorder %v1492, 0
        %v1728 = vand.u32 %v1492, 2139095040
        %v1729 = vshrl.u32 %v1728, 23
        %v1730 = vsub.s32 %v1729, 127
        %v1731 = vand.u32 2147483647, %v1492
        %v1732 = vand.u32 %v1731, 8388607
        %v1733 = vor.u32 %v1732, 8388608
        %v1734 = vsub.s32 0, %v1733
        %v1735 = vadd.s32 %v1730, 1
        %vm1736 = vcmp.gt.s32.totalorder %v1735, 0
        %v1737 = vsel %vm1736, %v1735, 0
        %v1738 = vshrl.u32 %v1737, 5
        %v1739 = vand.u32 %v1737, 31
        %v1740 = vsub.s32 32, %v1739
        %v1741 = vshrl.u32 683565275, %v1740
        %v1742 = vshll.u32 683565275, %v1739
        %v1743 = vshrl.u32 2475754826, %v1740
        %v1744 = vor.u32 %v1742, %v1743
        %v1745 = vshll.u32 2475754826, %v1739
        %v1746 = vshrl.u32 2131351028, %v1740
        %v1747 = vor.u32 %v1745, %v1746
        %v1748 = vshll.u32 2131351028, %v1739
        %v1749 = vshrl.u32 2102212464, %v1740
        %v1750 = vor.u32 %v1748, %v1749
        %v1751 = vshll.u32 2102212464, %v1739
        %v1752 = vshrl.u32 920167782, %v1740
        %v1753 = vor.u32 %v1751, %v1752
        %v1754 = vshll.u32 920167782, %v1739
        %v1755 = vshrl.u32 1326507024, %v1740
        %v1756 = vor.u32 %v1754, %v1755
        %vm1757 = vcmp.lt.s32.totalorder %v1738, 1
        %vm1758 = vcmp.lt.s32.totalorder %v1738, 2
        %vm1759 = vcmp.lt.s32.totalorder %v1738, 3
        %vm1760 = vcmp.lt.s32.totalorder %v1738, 4
        %v1761 = vsel %vm1757, %v1741, %v1744
        %v1762 = vsel %vm1760, %v1750, 2102212464
        %v1763 = vsel %vm1759, %v1747, %v1762
        %v1764 = vsel %vm1758, %v1761, %v1763
        %v1765 = vsel %vm1757, %v1744, %v1747
        %v1766 = vsel %vm1760, %v1753, 920167782
        %v1767 = vsel %vm1759, %v1750, %v1766
        %v1768 = vsel %vm1758, %v1765, %v1767
        %v1769 = vsel %vm1757, %v1747, %v1750
        %v1770 = vsel %vm1760, %v1756, 1326507024
        %v1771 = vsel %vm1759, %v1753, %v1770
        %v1772 = vsel %vm1758, %v1769, %v1771
        %v1773 = vshll.u32 %v1733, 8
        %v1774 = vmul.u32.u64.compose %v1773, %v1772
        %v1775 = vextract.low.u32 %v1774
        %v1776 = vextract.high.u32 %v1774
        %v1777 = vmul.u32.u64.compose %v1773, %v1768
        %v1778 = vextract.low.u32 %v1777
        %v1779 = vextract.high.u32 %v1777
        %v1780 = vmul.u32 %v1773, %v1764
        %v1781 = vadd.s32 %v1776, %v1778
        %vm1782 = vc.u32 %v1776, %v1778
        %v1783 = vadd.s32 %v1779, 1
        %v1784 = vsel %vm1782, %v1783, %v1779
        %v1785 = vadd.s32 %v1780, %v1784
        %v1786 = vadd.s32 %v1785, 536870912
        %v1787 = vshrl.u32 %v1786, 30
        %v1788 = vshll.u32 %v1787, 30
        %v1789 = vsub.s32 %v1785, %v1788
        %vm1790 = vcmp.lt.s32.totalorder %v1789, 0
        %v1791 = vsub.s32 0, %v1789
        %v1792 = vsel %vm1790, %v1791, %v1789
        %v1793 = vclz %v1792
        %v1794 = vsub.s32 %v1793, 2
        %vm1795 = vcmp.gt.s32.totalorder 0, %v1794
        %v1796 = vsel %vm1795, 0, %v1794
        %v1797 = vsub.s32 32, %v1796
        %v1798 = vshll.u32 %v1789, %v1796
        %v1799 = vshrl.u32 %v1781, %v1797
        %v1800 = vor.u32 %v1798, %v1799
        %v1801 = vsub.s32 4294967266, %v1796
        %v1802 = vadd.s32 %v1801, 127
        %v1803 = vshll.u32 %v1802, 23
        %v1804 = vor.u32 4788187, %v1803
        %v1805 = vand.u32 2147483647, %v1804
        %v1807 = vcvt.s32.f32 %v1800
        %v1808 = vmul.f32 %v1807, %v1805
        %v1809 = vxor.u32 %v1808, 2147483648
        %v1810 = vsel %vm1727, %v1809, %v1808
        %v1811 = vsub.s32 4, %v1787
        %v1812 = vsel %vm1727, %v1811, %v1787
        %v1813 = vsel %vm1726, %v1492, %v1810
        %v1814 = vsel %vm1726, 0, %v1812
        %v1815 = vcosq.f32.pop %v1813
        %v1816 = vsinq.f32.pop %v1813
        %vm1817 = vweird.f32 %v1492
        %v1818 = vadd.s32 %v1814, 3
        %v1819 = vand.u32 %v1818, 3
        %vm1820 = vcmp.lt.s32.totalorder %v1819, 2
        %vm1821 = vcmp.eq.s32.totalorder %v1819, 0
        %v1822 = vxor.u32 %v1816, 2147483648
        %v1823 = vsel %vm1821, %v1815, %v1822
        %vm1824 = vcmp.eq.s32.totalorder %v1819, 2
        %v1825 = vxor.u32 %v1815, 2147483648
        %v1826 = vsel %vm1824, %v1825, %v1816
        %v1827 = vsel %vm1820, %v1823, %v1826
        %v1828 = vsel %vm1817, nan, %v1827
        %v1829 = vand.u32 2147483647, %v1494
        %vm1830 = vcmp.le.f32.partialorder %v1829, 0.7853982
        %vm1831 = vcmp.lt.s32.totalorder %v1494, 0
        %v1832 = vand.u32 %v1494, 2139095040
        %v1833 = vshrl.u32 %v1832, 23
        %v1834 = vsub.s32 %v1833, 127
        %v1835 = vand.u32 2147483647, %v1494
        %v1836 = vand.u32 %v1835, 8388607
        %v1837 = vor.u32 %v1836, 8388608
        %v1838 = vsub.s32 0, %v1837
        %v1839 = vadd.s32 %v1834, 1
        %vm1840 = vcmp.gt.s32.totalorder %v1839, 0
        %v1841 = vsel %vm1840, %v1839, 0
        %v1842 = vshrl.u32 %v1841, 5
        %v1843 = vand.u32 %v1841, 31
        %v1844 = vsub.s32 32, %v1843
        %v1845 = vshrl.u32 683565275, %v1844
        %v1846 = vshll.u32 683565275, %v1843
        %v1847 = vshrl.u32 2475754826, %v1844
        %v1848 = vor.u32 %v1846, %v1847
        %v1849 = vshll.u32 2475754826, %v1843
        %v1850 = vshrl.u32 2131351028, %v1844
        %v1851 = vor.u32 %v1849, %v1850
        %v1852 = vshll.u32 2131351028, %v1843
        %v1853 = vshrl.u32 2102212464, %v1844
        %v1854 = vor.u32 %v1852, %v1853
        %v1855 = vshll.u32 2102212464, %v1843
        %v1856 = vshrl.u32 920167782, %v1844
        %v1857 = vor.u32 %v1855, %v1856
        %v1858 = vshll.u32 920167782, %v1843
        %v1859 = vshrl.u32 1326507024, %v1844
        %v1860 = vor.u32 %v1858, %v1859
        %vm1861 = vcmp.lt.s32.totalorder %v1842, 1
        %vm1862 = vcmp.lt.s32.totalorder %v1842, 2
        %vm1863 = vcmp.lt.s32.totalorder %v1842, 3
        %vm1864 = vcmp.lt.s32.totalorder %v1842, 4
        %v1865 = vsel %vm1861, %v1845, %v1848
        %v1866 = vsel %vm1864, %v1854, 2102212464
        %v1867 = vsel %vm1863, %v1851, %v1866
        %v1868 = vsel %vm1862, %v1865, %v1867
        %v1869 = vsel %vm1861, %v1848, %v1851
        %v1870 = vsel %vm1864, %v1857, 920167782
        %v1871 = vsel %vm1863, %v1854, %v1870
        %v1872 = vsel %vm1862, %v1869, %v1871
        %v1873 = vsel %vm1861, %v1851, %v1854
        %v1874 = vsel %vm1864, %v1860, 1326507024
        %v1875 = vsel %vm1863, %v1857, %v1874
        %v1876 = vsel %vm1862, %v1873, %v1875
        %v1877 = vshll.u32 %v1837, 8
        %v1878 = vmul.u32.u64.compose %v1877, %v1876
        %v1879 = vextract.low.u32 %v1878
        %v1880 = vextract.high.u32 %v1878
        %v1881 = vmul.u32.u64.compose %v1877, %v1872
        %v1882 = vextract.low.u32 %v1881
        %v1883 = vextract.high.u32 %v1881
        %v1884 = vmul.u32 %v1877, %v1868
        %v1885 = vadd.s32 %v1880, %v1882
        %vm1886 = vc.u32 %v1880, %v1882
        %v1887 = vadd.s32 %v1883, 1
        %v1888 = vsel %vm1886, %v1887, %v1883
        %v1889 = vadd.s32 %v1884, %v1888
        %v1890 = vadd.s32 %v1889, 536870912
        %v1891 = vshrl.u32 %v1890, 30
        %v1892 = vshll.u32 %v1891, 30
        %v1893 = vsub.s32 %v1889, %v1892
        %vm1894 = vcmp.lt.s32.totalorder %v1893, 0
        %v1895 = vsub.s32 0, %v1893
        %v1896 = vsel %vm1894, %v1895, %v1893
        %v1897 = vclz %v1896
        %v1898 = vsub.s32 %v1897, 2
        %vm1899 = vcmp.gt.s32.totalorder 0, %v1898
        %v1900 = vsel %vm1899, 0, %v1898
        %v1901 = vsub.s32 32, %v1900
        %v1902 = vshll.u32 %v1893, %v1900
        %v1903 = vshrl.u32 %v1885, %v1901
        %v1904 = vor.u32 %v1902, %v1903
        %v1905 = vsub.s32 4294967266, %v1900
        %v1906 = vadd.s32 %v1905, 127
        %v1907 = vshll.u32 %v1906, 23
        %v1908 = vor.u32 4788187, %v1907
        %v1909 = vand.u32 2147483647, %v1908
        %v1911 = vcvt.s32.f32 %v1904
        %v1912 = vmul.f32 %v1911, %v1909
        %v1913 = vxor.u32 %v1912, 2147483648
        %v1914 = vsel %vm1831, %v1913, %v1912
        %v1915 = vsub.s32 4, %v1891
        %v1916 = vsel %vm1831, %v1915, %v1891
        %v1917 = vsel %vm1830, %v1494, %v1914
        %v1918 = vsel %vm1830, 0, %v1916
        %v1919 = vcosq.f32.pop %v1917
        %v1920 = vsinq.f32.pop %v1917
        %vm1921 = vweird.f32 %v1494
        %v1922 = vadd.s32 %v1918, 3
        %v1923 = vand.u32 %v1922, 3
        %vm1924 = vcmp.lt.s32.totalorder %v1923, 2
        %vm1925 = vcmp.eq.s32.totalorder %v1923, 0
        %v1926 = vxor.u32 %v1920, 2147483648
        %v1927 = vsel %vm1925, %v1919, %v1926
        %vm1928 = vcmp.eq.s32.totalorder %v1923, 2
        %v1929 = vxor.u32 %v1919, 2147483648
        %v1930 = vsel %vm1928, %v1929, %v1920
        %v1931 = vsel %vm1924, %v1927, %v1930
        %v1932 = vsel %vm1921, nan, %v1931
        %v1933 = vand.u32 2147483647, %v835
        %vm1934 = vcmp.le.f32.partialorder %v1933, 0.7853982
        %vm1935 = vcmp.lt.s32.totalorder %v835, 0
        %v1936 = vand.u32 %v835, 2139095040
        %v1937 = vshrl.u32 %v1936, 23
        %v1938 = vsub.s32 %v1937, 127
        %v1939 = vand.u32 2147483647, %v835
        %v1940 = vand.u32 %v1939, 8388607
        %v1941 = vor.u32 %v1940, 8388608
        %v1942 = vsub.s32 0, %v1941
        %v1943 = vadd.s32 %v1938, 1
        %vm1944 = vcmp.gt.s32.totalorder %v1943, 0
        %v1945 = vsel %vm1944, %v1943, 0
        %v1946 = vshrl.u32 %v1945, 5
        %v1947 = vand.u32 %v1945, 31
        %v1948 = vsub.s32 32, %v1947
        %v1949 = vshrl.u32 683565275, %v1948
        %v1950 = vshll.u32 683565275, %v1947
        %v1951 = vshrl.u32 2475754826, %v1948
        %v1952 = vor.u32 %v1950, %v1951
        %v1953 = vshll.u32 2475754826, %v1947
        %v1954 = vshrl.u32 2131351028, %v1948
        %v1955 = vor.u32 %v1953, %v1954
        %v1956 = vshll.u32 2131351028, %v1947
        %v1957 = vshrl.u32 2102212464, %v1948
        %v1958 = vor.u32 %v1956, %v1957
        %v1959 = vshll.u32 2102212464, %v1947
        %v1960 = vshrl.u32 920167782, %v1948
        %v1961 = vor.u32 %v1959, %v1960
        %v1962 = vshll.u32 920167782, %v1947
        %v1963 = vshrl.u32 1326507024, %v1948
        %v1964 = vor.u32 %v1962, %v1963
        %vm1965 = vcmp.lt.s32.totalorder %v1946, 1
        %vm1966 = vcmp.lt.s32.totalorder %v1946, 2
        %vm1967 = vcmp.lt.s32.totalorder %v1946, 3
        %vm1968 = vcmp.lt.s32.totalorder %v1946, 4
        %v1969 = vsel %vm1965, %v1949, %v1952
        %v1970 = vsel %vm1968, %v1958, 2102212464
        %v1971 = vsel %vm1967, %v1955, %v1970
        %v1972 = vsel %vm1966, %v1969, %v1971
        %v1973 = vsel %vm1965, %v1952, %v1955
        %v1974 = vsel %vm1968, %v1961, 920167782
        %v1975 = vsel %vm1967, %v1958, %v1974
        %v1976 = vsel %vm1966, %v1973, %v1975
        %v1977 = vsel %vm1965, %v1955, %v1958
        %v1978 = vsel %vm1968, %v1964, 1326507024
        %v1979 = vsel %vm1967, %v1961, %v1978
        %v1980 = vsel %vm1966, %v1977, %v1979
        %v1981 = vshll.u32 %v1941, 8
        %v1982 = vmul.u32.u64.compose %v1981, %v1980
        %v1983 = vextract.low.u32 %v1982
        %v1984 = vextract.high.u32 %v1982
        %v1985 = vmul.u32.u64.compose %v1981, %v1976
        %v1986 = vextract.low.u32 %v1985
        %v1987 = vextract.high.u32 %v1985
        %v1988 = vmul.u32 %v1981, %v1972
        %v1989 = vadd.s32 %v1984, %v1986
        %vm1990 = vc.u32 %v1984, %v1986
        %v1991 = vadd.s32 %v1987, 1
        %v1992 = vsel %vm1990, %v1991, %v1987
        %v1993 = vadd.s32 %v1988, %v1992
        %v1994 = vadd.s32 %v1993, 536870912
        %v1995 = vshrl.u32 %v1994, 30
        %v1996 = vshll.u32 %v1995, 30
        %v1997 = vsub.s32 %v1993, %v1996
        %vm1998 = vcmp.lt.s32.totalorder %v1997, 0
        %v1999 = vsub.s32 0, %v1997
        %v2000 = vsel %vm1998, %v1999, %v1997
        %v2001 = vclz %v2000
        %v2002 = vsub.s32 %v2001, 2
        %vm2003 = vcmp.gt.s32.totalorder 0, %v2002
        %v2004 = vsel %vm2003, 0, %v2002
        %v2005 = vsub.s32 32, %v2004
        %v2006 = vshll.u32 %v1997, %v2004
        %v2007 = vshrl.u32 %v1989, %v2005
        %v2008 = vor.u32 %v2006, %v2007
        %v2009 = vsub.s32 4294967266, %v2004
        %v2010 = vadd.s32 %v2009, 127
        %v2011 = vshll.u32 %v2010, 23
        %v2012 = vor.u32 4788187, %v2011
        %v2013 = vand.u32 2147483647, %v2012
        %v2015 = vcvt.s32.f32 %v2008
        %v2016 = vmul.f32 %v2015, %v2013
        %v2017 = vxor.u32 %v2016, 2147483648
        %v2018 = vsel %vm1935, %v2017, %v2016
        %v2019 = vsub.s32 4, %v1995
        %v2020 = vsel %vm1935, %v2019, %v1995
        %v2021 = vsel %vm1934, %v835, %v2018
        %v2022 = vsel %vm1934, 0, %v2020
        %v2023 = vcosq.f32.pop %v2021
        %v2024 = vsinq.f32.pop %v2021
        %vm2025 = vweird.f32 %v835
        %v2026 = vadd.s32 %v2022, 3
        %v2027 = vand.u32 %v2026, 3
        %vm2028 = vcmp.lt.s32.totalorder %v2027, 2
        %vm2029 = vcmp.eq.s32.totalorder %v2027, 0
        %v2030 = vxor.u32 %v2024, 2147483648
        %v2031 = vsel %vm2029, %v2023, %v2030
        %vm2032 = vcmp.eq.s32.totalorder %v2027, 2
        %v2033 = vxor.u32 %v2023, 2147483648
        %v2034 = vsel %vm2032, %v2033, %v2024
        %v2035 = vsel %vm2028, %v2031, %v2034
        %v2036 = vsel %vm2025, nan, %v2035
        %v2037 = vand.u32 2147483647, %v837
        %vm2038 = vcmp.le.f32.partialorder %v2037, 0.7853982
        %vm2039 = vcmp.lt.s32.totalorder %v837, 0
        %v2040 = vand.u32 %v837, 2139095040
        %v2041 = vshrl.u32 %v2040, 23
        %v2042 = vsub.s32 %v2041, 127
        %v2043 = vand.u32 2147483647, %v837
        %v2044 = vand.u32 %v2043, 8388607
        %v2045 = vor.u32 %v2044, 8388608
        %v2046 = vsub.s32 0, %v2045
        %v2047 = vadd.s32 %v2042, 1
        %vm2048 = vcmp.gt.s32.totalorder %v2047, 0
        %v2049 = vsel %vm2048, %v2047, 0
        %v2050 = vshrl.u32 %v2049, 5
        %v2051 = vand.u32 %v2049, 31
        %v2052 = vsub.s32 32, %v2051
        %v2053 = vshrl.u32 683565275, %v2052
        %v2054 = vshll.u32 683565275, %v2051
        %v2055 = vshrl.u32 2475754826, %v2052
        %v2056 = vor.u32 %v2054, %v2055
        %v2057 = vshll.u32 2475754826, %v2051
        %v2058 = vshrl.u32 2131351028, %v2052
        %v2059 = vor.u32 %v2057, %v2058
        %v2060 = vshll.u32 2131351028, %v2051
        %v2061 = vshrl.u32 2102212464, %v2052
        %v2062 = vor.u32 %v2060, %v2061
        %v2063 = vshll.u32 2102212464, %v2051
        %v2064 = vshrl.u32 920167782, %v2052
        %v2065 = vor.u32 %v2063, %v2064
        %v2066 = vshll.u32 920167782, %v2051
        %v2067 = vshrl.u32 1326507024, %v2052
        %v2068 = vor.u32 %v2066, %v2067
        %vm2069 = vcmp.lt.s32.totalorder %v2050, 1
        %vm2070 = vcmp.lt.s32.totalorder %v2050, 2
        %vm2071 = vcmp.lt.s32.totalorder %v2050, 3
        %vm2072 = vcmp.lt.s32.totalorder %v2050, 4
        %v2073 = vsel %vm2069, %v2053, %v2056
        %v2074 = vsel %vm2072, %v2062, 2102212464
        %v2075 = vsel %vm2071, %v2059, %v2074
        %v2076 = vsel %vm2070, %v2073, %v2075
        %v2077 = vsel %vm2069, %v2056, %v2059
        %v2078 = vsel %vm2072, %v2065, 920167782
        %v2079 = vsel %vm2071, %v2062, %v2078
        %v2080 = vsel %vm2070, %v2077, %v2079
        %v2081 = vsel %vm2069, %v2059, %v2062
        %v2082 = vsel %vm2072, %v2068, 1326507024
        %v2083 = vsel %vm2071, %v2065, %v2082
        %v2084 = vsel %vm2070, %v2081, %v2083
        %v2085 = vshll.u32 %v2045, 8
        %v2086 = vmul.u32.u64.compose %v2085, %v2084
        %v2087 = vextract.low.u32 %v2086
        %v2088 = vextract.high.u32 %v2086
        %v2089 = vmul.u32.u64.compose %v2085, %v2080
        %v2090 = vextract.low.u32 %v2089
        %v2091 = vextract.high.u32 %v2089
        %v2092 = vmul.u32 %v2085, %v2076
        %v2093 = vadd.s32 %v2088, %v2090
        %vm2094 = vc.u32 %v2088, %v2090
        %v2095 = vadd.s32 %v2091, 1
        %v2096 = vsel %vm2094, %v2095, %v2091
        %v2097 = vadd.s32 %v2092, %v2096
        %v2098 = vadd.s32 %v2097, 536870912
        %v2099 = vshrl.u32 %v2098, 30
        %v2100 = vshll.u32 %v2099, 30
        %v2101 = vsub.s32 %v2097, %v2100
        %vm2102 = vcmp.lt.s32.totalorder %v2101, 0
        %v2103 = vsub.s32 0, %v2101
        %v2104 = vsel %vm2102, %v2103, %v2101
        %v2105 = vclz %v2104
        %v2106 = vsub.s32 %v2105, 2
        %vm2107 = vcmp.gt.s32.totalorder 0, %v2106
        %v2108 = vsel %vm2107, 0, %v2106
        %v2109 = vsub.s32 32, %v2108
        %v2110 = vshll.u32 %v2101, %v2108
        %v2111 = vshrl.u32 %v2093, %v2109
        %v2112 = vor.u32 %v2110, %v2111
        %v2113 = vsub.s32 4294967266, %v2108
        %v2114 = vadd.s32 %v2113, 127
        %v2115 = vshll.u32 %v2114, 23
        %v2116 = vor.u32 4788187, %v2115
        %v2117 = vand.u32 2147483647, %v2116
        %v2119 = vcvt.s32.f32 %v2112
        %v2120 = vmul.f32 %v2119, %v2117
        %v2121 = vxor.u32 %v2120, 2147483648
        %v2122 = vsel %vm2039, %v2121, %v2120
        %v2123 = vsub.s32 4, %v2099
        %v2124 = vsel %vm2039, %v2123, %v2099
        %v2125 = vsel %vm2038, %v837, %v2122
        %v2126 = vsel %vm2038, 0, %v2124
        %v2127 = vcosq.f32.pop %v2125
        %v2128 = vsinq.f32.pop %v2125
        %vm2129 = vweird.f32 %v837
        %v2130 = vadd.s32 %v2126, 3
        %v2131 = vand.u32 %v2130, 3
        %vm2132 = vcmp.lt.s32.totalorder %v2131, 2
        %vm2133 = vcmp.eq.s32.totalorder %v2131, 0
        %v2134 = vxor.u32 %v2128, 2147483648
        %v2135 = vsel %vm2133, %v2127, %v2134
        %vm2136 = vcmp.eq.s32.totalorder %v2131, 2
        %v2137 = vxor.u32 %v2127, 2147483648
        %v2138 = vsel %vm2136, %v2137, %v2128
        %v2139 = vsel %vm2132, %v2135, %v2138
        %v2140 = vsel %vm2129, nan, %v2139
        %v2141 = vand.u32 2147483647, %v1499
        %vm2142 = vcmp.le.f32.partialorder %v2141, 0.7853982
        %vm2143 = vcmp.lt.s32.totalorder %v1499, 0
        %v2144 = vand.u32 %v1499, 2139095040
        %v2145 = vshrl.u32 %v2144, 23
        %v2146 = vsub.s32 %v2145, 127
        %v2147 = vand.u32 2147483647, %v1499
        %v2148 = vand.u32 %v2147, 8388607
        %v2149 = vor.u32 %v2148, 8388608
        %v2150 = vsub.s32 0, %v2149
        %v2151 = vadd.s32 %v2146, 1
        %vm2152 = vcmp.gt.s32.totalorder %v2151, 0
        %v2153 = vsel %vm2152, %v2151, 0
        %v2154 = vshrl.u32 %v2153, 5
        %v2155 = vand.u32 %v2153, 31
        %v2156 = vsub.s32 32, %v2155
        %v2157 = vshrl.u32 683565275, %v2156
        %v2158 = vshll.u32 683565275, %v2155
        %v2159 = vshrl.u32 2475754826, %v2156
        %v2160 = vor.u32 %v2158, %v2159
        %v2161 = vshll.u32 2475754826, %v2155
        %v2162 = vshrl.u32 2131351028, %v2156
        %v2163 = vor.u32 %v2161, %v2162
        %v2164 = vshll.u32 2131351028, %v2155
        %v2165 = vshrl.u32 2102212464, %v2156
        %v2166 = vor.u32 %v2164, %v2165
        %v2167 = vshll.u32 2102212464, %v2155
        %v2168 = vshrl.u32 920167782, %v2156
        %v2169 = vor.u32 %v2167, %v2168
        %v2170 = vshll.u32 920167782, %v2155
        %v2171 = vshrl.u32 1326507024, %v2156
        %v2172 = vor.u32 %v2170, %v2171
        %vm2173 = vcmp.lt.s32.totalorder %v2154, 1
        %vm2174 = vcmp.lt.s32.totalorder %v2154, 2
        %vm2175 = vcmp.lt.s32.totalorder %v2154, 3
        %vm2176 = vcmp.lt.s32.totalorder %v2154, 4
        %v2177 = vsel %vm2173, %v2157, %v2160
        %v2178 = vsel %vm2176, %v2166, 2102212464
        %v2179 = vsel %vm2175, %v2163, %v2178
        %v2180 = vsel %vm2174, %v2177, %v2179
        %v2181 = vsel %vm2173, %v2160, %v2163
        %v2182 = vsel %vm2176, %v2169, 920167782
        %v2183 = vsel %vm2175, %v2166, %v2182
        %v2184 = vsel %vm2174, %v2181, %v2183
        %v2185 = vsel %vm2173, %v2163, %v2166
        %v2186 = vsel %vm2176, %v2172, 1326507024
        %v2187 = vsel %vm2175, %v2169, %v2186
        %v2188 = vsel %vm2174, %v2185, %v2187
        %v2189 = vshll.u32 %v2149, 8
        %v2190 = vmul.u32.u64.compose %v2189, %v2188
        %v2191 = vextract.low.u32 %v2190
        %v2192 = vextract.high.u32 %v2190
        %v2193 = vmul.u32.u64.compose %v2189, %v2184
        %v2194 = vextract.low.u32 %v2193
        %v2195 = vextract.high.u32 %v2193
        %v2196 = vmul.u32 %v2189, %v2180
        %v2197 = vadd.s32 %v2192, %v2194
        %vm2198 = vc.u32 %v2192, %v2194
        %v2199 = vadd.s32 %v2195, 1
        %v2200 = vsel %vm2198, %v2199, %v2195
        %v2201 = vadd.s32 %v2196, %v2200
        %v2202 = vadd.s32 %v2201, 536870912
        %v2203 = vshrl.u32 %v2202, 30
        %v2204 = vshll.u32 %v2203, 30
        %v2205 = vsub.s32 %v2201, %v2204
        %vm2206 = vcmp.lt.s32.totalorder %v2205, 0
        %v2207 = vsub.s32 0, %v2205
        %v2208 = vsel %vm2206, %v2207, %v2205
        %v2209 = vclz %v2208
        %v2210 = vsub.s32 %v2209, 2
        %vm2211 = vcmp.gt.s32.totalorder 0, %v2210
        %v2212 = vsel %vm2211, 0, %v2210
        %v2213 = vsub.s32 32, %v2212
        %v2214 = vshll.u32 %v2205, %v2212
        %v2215 = vshrl.u32 %v2197, %v2213
        %v2216 = vor.u32 %v2214, %v2215
        %v2217 = vsub.s32 4294967266, %v2212
        %v2218 = vadd.s32 %v2217, 127
        %v2219 = vshll.u32 %v2218, 23
        %v2220 = vor.u32 4788187, %v2219
        %v2221 = vand.u32 2147483647, %v2220
        %v2223 = vcvt.s32.f32 %v2216
        %v2224 = vmul.f32 %v2223, %v2221
        %v2225 = vxor.u32 %v2224, 2147483648
        %v2226 = vsel %vm2143, %v2225, %v2224
        %v2227 = vsub.s32 4, %v2203
        %v2228 = vsel %vm2143, %v2227, %v2203
        %v2229 = vsel %vm2142, %v1499, %v2226
        %v2230 = vsel %vm2142, 0, %v2228
        %v2231 = vcosq.f32.pop %v2229
        %v2232 = vsinq.f32.pop %v2229
        %vm2233 = vweird.f32 %v1499
        %v2234 = vadd.s32 %v2230, 3
        %v2235 = vand.u32 %v2234, 3
        %vm2236 = vcmp.lt.s32.totalorder %v2235, 2
        %vm2237 = vcmp.eq.s32.totalorder %v2235, 0
        %v2238 = vxor.u32 %v2232, 2147483648
        %v2239 = vsel %vm2237, %v2231, %v2238
        %vm2240 = vcmp.eq.s32.totalorder %v2235, 2
        %v2241 = vxor.u32 %v2231, 2147483648
        %v2242 = vsel %vm2240, %v2241, %v2232
        %v2243 = vsel %vm2236, %v2239, %v2242
        %v2244 = vsel %vm2233, nan, %v2243
        %v2245 = vand.u32 2147483647, %v1501
        %vm2246 = vcmp.le.f32.partialorder %v2245, 0.7853982
        %vm2247 = vcmp.lt.s32.totalorder %v1501, 0
        %v2248 = vand.u32 %v1501, 2139095040
        %v2249 = vshrl.u32 %v2248, 23
        %v2250 = vsub.s32 %v2249, 127
        %v2251 = vand.u32 2147483647, %v1501
        %v2252 = vand.u32 %v2251, 8388607
        %v2253 = vor.u32 %v2252, 8388608
        %v2254 = vsub.s32 0, %v2253
        %v2255 = vadd.s32 %v2250, 1
        %vm2256 = vcmp.gt.s32.totalorder %v2255, 0
        %v2257 = vsel %vm2256, %v2255, 0
        %v2258 = vshrl.u32 %v2257, 5
        %v2259 = vand.u32 %v2257, 31
        %v2260 = vsub.s32 32, %v2259
        %v2261 = vshrl.u32 683565275, %v2260
        %v2262 = vshll.u32 683565275, %v2259
        %v2263 = vshrl.u32 2475754826, %v2260
        %v2264 = vor.u32 %v2262, %v2263
        %v2265 = vshll.u32 2475754826, %v2259
        %v2266 = vshrl.u32 2131351028, %v2260
        %v2267 = vor.u32 %v2265, %v2266
        %v2268 = vshll.u32 2131351028, %v2259
        %v2269 = vshrl.u32 2102212464, %v2260
        %v2270 = vor.u32 %v2268, %v2269
        %v2271 = vshll.u32 2102212464, %v2259
        %v2272 = vshrl.u32 920167782, %v2260
        %v2273 = vor.u32 %v2271, %v2272
        %v2274 = vshll.u32 920167782, %v2259
        %v2275 = vshrl.u32 1326507024, %v2260
        %v2276 = vor.u32 %v2274, %v2275
        %vm2277 = vcmp.lt.s32.totalorder %v2258, 1
        %vm2278 = vcmp.lt.s32.totalorder %v2258, 2
        %vm2279 = vcmp.lt.s32.totalorder %v2258, 3
        %vm2280 = vcmp.lt.s32.totalorder %v2258, 4
        %v2281 = vsel %vm2277, %v2261, %v2264
        %v2282 = vsel %vm2280, %v2270, 2102212464
        %v2283 = vsel %vm2279, %v2267, %v2282
        %v2284 = vsel %vm2278, %v2281, %v2283
        %v2285 = vsel %vm2277, %v2264, %v2267
        %v2286 = vsel %vm2280, %v2273, 920167782
        %v2287 = vsel %vm2279, %v2270, %v2286
        %v2288 = vsel %vm2278, %v2285, %v2287
        %v2289 = vsel %vm2277, %v2267, %v2270
        %v2290 = vsel %vm2280, %v2276, 1326507024
        %v2291 = vsel %vm2279, %v2273, %v2290
        %v2292 = vsel %vm2278, %v2289, %v2291
        %v2293 = vshll.u32 %v2253, 8
        %v2294 = vmul.u32.u64.compose %v2293, %v2292
        %v2295 = vextract.low.u32 %v2294
        %v2296 = vextract.high.u32 %v2294
        %v2297 = vmul.u32.u64.compose %v2293, %v2288
        %v2298 = vextract.low.u32 %v2297
        %v2299 = vextract.high.u32 %v2297
        %v2300 = vmul.u32 %v2293, %v2284
        %v2301 = vadd.s32 %v2296, %v2298
        %vm2302 = vc.u32 %v2296, %v2298
        %v2303 = vadd.s32 %v2299, 1
        %v2304 = vsel %vm2302, %v2303, %v2299
        %v2305 = vadd.s32 %v2300, %v2304
        %v2306 = vadd.s32 %v2305, 536870912
        %v2307 = vshrl.u32 %v2306, 30
        %v2308 = vshll.u32 %v2307, 30
        %v2309 = vsub.s32 %v2305, %v2308
        %vm2310 = vcmp.lt.s32.totalorder %v2309, 0
        %v2311 = vsub.s32 0, %v2309
        %v2312 = vsel %vm2310, %v2311, %v2309
        %v2313 = vclz %v2312
        %v2314 = vsub.s32 %v2313, 2
        %vm2315 = vcmp.gt.s32.totalorder 0, %v2314
        %v2316 = vsel %vm2315, 0, %v2314
        %v2317 = vsub.s32 32, %v2316
        %v2318 = vshll.u32 %v2309, %v2316
        %v2319 = vshrl.u32 %v2301, %v2317
        %v2320 = vor.u32 %v2318, %v2319
        %v2321 = vsub.s32 4294967266, %v2316
        %v2322 = vadd.s32 %v2321, 127
        %v2323 = vshll.u32 %v2322, 23
        %v2324 = vor.u32 4788187, %v2323
        %v2325 = vand.u32 2147483647, %v2324
        %v2327 = vcvt.s32.f32 %v2320
        %v2328 = vmul.f32 %v2327, %v2325
        %v2329 = vxor.u32 %v2328, 2147483648
        %v2330 = vsel %vm2247, %v2329, %v2328
        %v2331 = vsub.s32 4, %v2307
        %v2332 = vsel %vm2247, %v2331, %v2307
        %v2333 = vsel %vm2246, %v1501, %v2330
        %v2334 = vsel %vm2246, 0, %v2332
        %v2335 = vcosq.f32.pop %v2333
        %v2336 = vsinq.f32.pop %v2333
        %vm2337 = vweird.f32 %v1501
        %v2338 = vadd.s32 %v2334, 3
        %v2339 = vand.u32 %v2338, 3
        %vm2340 = vcmp.lt.s32.totalorder %v2339, 2
        %vm2341 = vcmp.eq.s32.totalorder %v2339, 0
        %v2342 = vxor.u32 %v2336, 2147483648
        %v2343 = vsel %vm2341, %v2335, %v2342
        %vm2344 = vcmp.eq.s32.totalorder %v2339, 2
        %v2345 = vxor.u32 %v2335, 2147483648
        %v2346 = vsel %vm2344, %v2345, %v2336
        %v2347 = vsel %vm2340, %v2343, %v2346
        %v2348 = vsel %vm2337, nan, %v2347
        %v2349 = vand.u32 2147483647, %v842
        %vm2350 = vcmp.le.f32.partialorder %v2349, 0.7853982
        %vm2351 = vcmp.lt.s32.totalorder %v842, 0
        %v2352 = vand.u32 %v842, 2139095040
        %v2353 = vshrl.u32 %v2352, 23
        %v2354 = vsub.s32 %v2353, 127
        %v2355 = vand.u32 2147483647, %v842
        %v2356 = vand.u32 %v2355, 8388607
        %v2357 = vor.u32 %v2356, 8388608
        %v2358 = vsub.s32 0, %v2357
        %v2359 = vadd.s32 %v2354, 1
        %vm2360 = vcmp.gt.s32.totalorder %v2359, 0
        %v2361 = vsel %vm2360, %v2359, 0
        %v2362 = vshrl.u32 %v2361, 5
        %v2363 = vand.u32 %v2361, 31
        %v2364 = vsub.s32 32, %v2363
        %v2365 = vshrl.u32 683565275, %v2364
        %v2366 = vshll.u32 683565275, %v2363
        %v2367 = vshrl.u32 2475754826, %v2364
        %v2368 = vor.u32 %v2366, %v2367
        %v2369 = vshll.u32 2475754826, %v2363
        %v2370 = vshrl.u32 2131351028, %v2364
        %v2371 = vor.u32 %v2369, %v2370
        %v2372 = vshll.u32 2131351028, %v2363
        %v2373 = vshrl.u32 2102212464, %v2364
        %v2374 = vor.u32 %v2372, %v2373
        %v2375 = vshll.u32 2102212464, %v2363
        %v2376 = vshrl.u32 920167782, %v2364
        %v2377 = vor.u32 %v2375, %v2376
        %v2378 = vshll.u32 920167782, %v2363
        %v2379 = vshrl.u32 1326507024, %v2364
        %v2380 = vor.u32 %v2378, %v2379
        %vm2381 = vcmp.lt.s32.totalorder %v2362, 1
        %vm2382 = vcmp.lt.s32.totalorder %v2362, 2
        %vm2383 = vcmp.lt.s32.totalorder %v2362, 3
        %vm2384 = vcmp.lt.s32.totalorder %v2362, 4
        %v2385 = vsel %vm2381, %v2365, %v2368
        %v2386 = vsel %vm2384, %v2374, 2102212464
        %v2387 = vsel %vm2383, %v2371, %v2386
        %v2388 = vsel %vm2382, %v2385, %v2387
        %v2389 = vsel %vm2381, %v2368, %v2371
        %v2390 = vsel %vm2384, %v2377, 920167782
        %v2391 = vsel %vm2383, %v2374, %v2390
        %v2392 = vsel %vm2382, %v2389, %v2391
        %v2393 = vsel %vm2381, %v2371, %v2374
        %v2394 = vsel %vm2384, %v2380, 1326507024
        %v2395 = vsel %vm2383, %v2377, %v2394
        %v2396 = vsel %vm2382, %v2393, %v2395
        %v2397 = vshll.u32 %v2357, 8
        %v2398 = vmul.u32.u64.compose %v2397, %v2396
        %v2399 = vextract.low.u32 %v2398
        %v2400 = vextract.high.u32 %v2398
        %v2401 = vmul.u32.u64.compose %v2397, %v2392
        %v2402 = vextract.low.u32 %v2401
        %v2403 = vextract.high.u32 %v2401
        %v2404 = vmul.u32 %v2397, %v2388
        %v2405 = vadd.s32 %v2400, %v2402
        %vm2406 = vc.u32 %v2400, %v2402
        %v2407 = vadd.s32 %v2403, 1
        %v2408 = vsel %vm2406, %v2407, %v2403
        %v2409 = vadd.s32 %v2404, %v2408
        %v2410 = vadd.s32 %v2409, 536870912
        %v2411 = vshrl.u32 %v2410, 30
        %v2412 = vshll.u32 %v2411, 30
        %v2413 = vsub.s32 %v2409, %v2412
        %vm2414 = vcmp.lt.s32.totalorder %v2413, 0
        %v2415 = vsub.s32 0, %v2413
        %v2416 = vsel %vm2414, %v2415, %v2413
        %v2417 = vclz %v2416
        %v2418 = vsub.s32 %v2417, 2
        %vm2419 = vcmp.gt.s32.totalorder 0, %v2418
        %v2420 = vsel %vm2419, 0, %v2418
        %v2421 = vsub.s32 32, %v2420
        %v2422 = vshll.u32 %v2413, %v2420
        %v2423 = vshrl.u32 %v2405, %v2421
        %v2424 = vor.u32 %v2422, %v2423
        %v2425 = vsub.s32 4294967266, %v2420
        %v2426 = vadd.s32 %v2425, 127
        %v2427 = vshll.u32 %v2426, 23
        %v2428 = vor.u32 4788187, %v2427
        %v2429 = vand.u32 2147483647, %v2428
        %v2431 = vcvt.s32.f32 %v2424
        %v2432 = vmul.f32 %v2431, %v2429
        %v2433 = vxor.u32 %v2432, 2147483648
        %v2434 = vsel %vm2351, %v2433, %v2432
        %v2435 = vsub.s32 4, %v2411
        %v2436 = vsel %vm2351, %v2435, %v2411
        %v2437 = vsel %vm2350, %v842, %v2434
        %v2438 = vsel %vm2350, 0, %v2436
        %v2439 = vcosq.f32.pop %v2437
        %v2440 = vsinq.f32.pop %v2437
        %vm2441 = vweird.f32 %v842
        %v2442 = vadd.s32 %v2438, 3
        %v2443 = vand.u32 %v2442, 3
        %vm2444 = vcmp.lt.s32.totalorder %v2443, 2
        %vm2445 = vcmp.eq.s32.totalorder %v2443, 0
        %v2446 = vxor.u32 %v2440, 2147483648
        %v2447 = vsel %vm2445, %v2439, %v2446
        %vm2448 = vcmp.eq.s32.totalorder %v2443, 2
        %v2449 = vxor.u32 %v2439, 2147483648
        %v2450 = vsel %vm2448, %v2449, %v2440
        %v2451 = vsel %vm2444, %v2447, %v2450
        %v2452 = vsel %vm2441, nan, %v2451
        %v2453 = vand.u32 2147483647, %v844
        %vm2454 = vcmp.le.f32.partialorder %v2453, 0.7853982
        %vm2455 = vcmp.lt.s32.totalorder %v844, 0
        %v2456 = vand.u32 %v844, 2139095040
        %v2457 = vshrl.u32 %v2456, 23
        %v2458 = vsub.s32 %v2457, 127
        %v2459 = vand.u32 2147483647, %v844
        %v2460 = vand.u32 %v2459, 8388607
        %v2461 = vor.u32 %v2460, 8388608
        %v2462 = vsub.s32 0, %v2461
        %v2463 = vadd.s32 %v2458, 1
        %vm2464 = vcmp.gt.s32.totalorder %v2463, 0
        %v2465 = vsel %vm2464, %v2463, 0
        %v2466 = vshrl.u32 %v2465, 5
        %v2467 = vand.u32 %v2465, 31
        %v2468 = vsub.s32 32, %v2467
        %v2469 = vshrl.u32 683565275, %v2468
        %v2470 = vshll.u32 683565275, %v2467
        %v2471 = vshrl.u32 2475754826, %v2468
        %v2472 = vor.u32 %v2470, %v2471
        %v2473 = vshll.u32 2475754826, %v2467
        %v2474 = vshrl.u32 2131351028, %v2468
        %v2475 = vor.u32 %v2473, %v2474
        %v2476 = vshll.u32 2131351028, %v2467
        %v2477 = vshrl.u32 2102212464, %v2468
        %v2478 = vor.u32 %v2476, %v2477
        %v2479 = vshll.u32 2102212464, %v2467
        %v2480 = vshrl.u32 920167782, %v2468
        %v2481 = vor.u32 %v2479, %v2480
        %v2482 = vshll.u32 920167782, %v2467
        %v2483 = vshrl.u32 1326507024, %v2468
        %v2484 = vor.u32 %v2482, %v2483
        %vm2485 = vcmp.lt.s32.totalorder %v2466, 1
        %vm2486 = vcmp.lt.s32.totalorder %v2466, 2
        %vm2487 = vcmp.lt.s32.totalorder %v2466, 3
        %vm2488 = vcmp.lt.s32.totalorder %v2466, 4
        %v2489 = vsel %vm2485, %v2469, %v2472
        %v2490 = vsel %vm2488, %v2478, 2102212464
        %v2491 = vsel %vm2487, %v2475, %v2490
        %v2492 = vsel %vm2486, %v2489, %v2491
        %v2493 = vsel %vm2485, %v2472, %v2475
        %v2494 = vsel %vm2488, %v2481, 920167782
        %v2495 = vsel %vm2487, %v2478, %v2494
        %v2496 = vsel %vm2486, %v2493, %v2495
        %v2497 = vsel %vm2485, %v2475, %v2478
        %v2498 = vsel %vm2488, %v2484, 1326507024
        %v2499 = vsel %vm2487, %v2481, %v2498
        %v2500 = vsel %vm2486, %v2497, %v2499
        %v2501 = vshll.u32 %v2461, 8
        %v2502 = vmul.u32.u64.compose %v2501, %v2500
        %v2503 = vextract.low.u32 %v2502
        %v2504 = vextract.high.u32 %v2502
        %v2505 = vmul.u32.u64.compose %v2501, %v2496
        %v2506 = vextract.low.u32 %v2505
        %v2507 = vextract.high.u32 %v2505
        %v2508 = vmul.u32 %v2501, %v2492
        %v2509 = vadd.s32 %v2504, %v2506
        %vm2510 = vc.u32 %v2504, %v2506
        %v2511 = vadd.s32 %v2507, 1
        %v2512 = vsel %vm2510, %v2511, %v2507
        %v2513 = vadd.s32 %v2508, %v2512
        %v2514 = vadd.s32 %v2513, 536870912
        %v2515 = vshrl.u32 %v2514, 30
        %v2516 = vshll.u32 %v2515, 30
        %v2517 = vsub.s32 %v2513, %v2516
        %vm2518 = vcmp.lt.s32.totalorder %v2517, 0
        %v2519 = vsub.s32 0, %v2517
        %v2520 = vsel %vm2518, %v2519, %v2517
        %v2521 = vclz %v2520
        %v2522 = vsub.s32 %v2521, 2
        %vm2523 = vcmp.gt.s32.totalorder 0, %v2522
        %v2524 = vsel %vm2523, 0, %v2522
        %v2525 = vsub.s32 32, %v2524
        %v2526 = vshll.u32 %v2517, %v2524
        %v2527 = vshrl.u32 %v2509, %v2525
        %v2528 = vor.u32 %v2526, %v2527
        %v2529 = vsub.s32 4294967266, %v2524
        %v2530 = vadd.s32 %v2529, 127
        %v2531 = vshll.u32 %v2530, 23
        %v2532 = vor.u32 4788187, %v2531
        %v2533 = vand.u32 2147483647, %v2532
        %v2535 = vcvt.s32.f32 %v2528
        %v2536 = vmul.f32 %v2535, %v2533
        %v2537 = vxor.u32 %v2536, 2147483648
        %v2538 = vsel %vm2455, %v2537, %v2536
        %v2539 = vsub.s32 4, %v2515
        %v2540 = vsel %vm2455, %v2539, %v2515
        %v2541 = vsel %vm2454, %v844, %v2538
        %v2542 = vsel %vm2454, 0, %v2540
        %v2543 = vcosq.f32.pop %v2541
        %v2544 = vsinq.f32.pop %v2541
        %vm2545 = vweird.f32 %v844
        %v2546 = vadd.s32 %v2542, 3
        %v2547 = vand.u32 %v2546, 3
        %vm2548 = vcmp.lt.s32.totalorder %v2547, 2
        %vm2549 = vcmp.eq.s32.totalorder %v2547, 0
        %v2550 = vxor.u32 %v2544, 2147483648
        %v2551 = vsel %vm2549, %v2543, %v2550
        %vm2552 = vcmp.eq.s32.totalorder %v2547, 2
        %v2553 = vxor.u32 %v2543, 2147483648
        %v2554 = vsel %vm2552, %v2553, %v2544
        %v2555 = vsel %vm2548, %v2551, %v2554
        %v2556 = vsel %vm2545, nan, %v2555
        %v2557 = vand.u32 2147483647, %v1506
        %vm2558 = vcmp.le.f32.partialorder %v2557, 0.7853982
        %vm2559 = vcmp.lt.s32.totalorder %v1506, 0
        %v2560 = vand.u32 %v1506, 2139095040
        %v2561 = vshrl.u32 %v2560, 23
        %v2562 = vsub.s32 %v2561, 127
        %v2563 = vand.u32 2147483647, %v1506
        %v2564 = vand.u32 %v2563, 8388607
        %v2565 = vor.u32 %v2564, 8388608
        %v2566 = vsub.s32 0, %v2565
        %v2567 = vadd.s32 %v2562, 1
        %vm2568 = vcmp.gt.s32.totalorder %v2567, 0
        %v2569 = vsel %vm2568, %v2567, 0
        %v2570 = vshrl.u32 %v2569, 5
        %v2571 = vand.u32 %v2569, 31
        %v2572 = vsub.s32 32, %v2571
        %v2573 = vshrl.u32 683565275, %v2572
        %v2574 = vshll.u32 683565275, %v2571
        %v2575 = vshrl.u32 2475754826, %v2572
        %v2576 = vor.u32 %v2574, %v2575
        %v2577 = vshll.u32 2475754826, %v2571
        %v2578 = vshrl.u32 2131351028, %v2572
        %v2579 = vor.u32 %v2577, %v2578
        %v2580 = vshll.u32 2131351028, %v2571
        %v2581 = vshrl.u32 2102212464, %v2572
        %v2582 = vor.u32 %v2580, %v2581
        %v2583 = vshll.u32 2102212464, %v2571
        %v2584 = vshrl.u32 920167782, %v2572
        %v2585 = vor.u32 %v2583, %v2584
        %v2586 = vshll.u32 920167782, %v2571
        %v2587 = vshrl.u32 1326507024, %v2572
        %v2588 = vor.u32 %v2586, %v2587
        %vm2589 = vcmp.lt.s32.totalorder %v2570, 1
        %vm2590 = vcmp.lt.s32.totalorder %v2570, 2
        %vm2591 = vcmp.lt.s32.totalorder %v2570, 3
        %vm2592 = vcmp.lt.s32.totalorder %v2570, 4
        %v2593 = vsel %vm2589, %v2573, %v2576
        %v2594 = vsel %vm2592, %v2582, 2102212464
        %v2595 = vsel %vm2591, %v2579, %v2594
        %v2596 = vsel %vm2590, %v2593, %v2595
        %v2597 = vsel %vm2589, %v2576, %v2579
        %v2598 = vsel %vm2592, %v2585, 920167782
        %v2599 = vsel %vm2591, %v2582, %v2598
        %v2600 = vsel %vm2590, %v2597, %v2599
        %v2601 = vsel %vm2589, %v2579, %v2582
        %v2602 = vsel %vm2592, %v2588, 1326507024
        %v2603 = vsel %vm2591, %v2585, %v2602
        %v2604 = vsel %vm2590, %v2601, %v2603
        %v2605 = vshll.u32 %v2565, 8
        %v2606 = vmul.u32.u64.compose %v2605, %v2604
        %v2607 = vextract.low.u32 %v2606
        %v2608 = vextract.high.u32 %v2606
        %v2609 = vmul.u32.u64.compose %v2605, %v2600
        %v2610 = vextract.low.u32 %v2609
        %v2611 = vextract.high.u32 %v2609
        %v2612 = vmul.u32 %v2605, %v2596
        %v2613 = vadd.s32 %v2608, %v2610
        %vm2614 = vc.u32 %v2608, %v2610
        %v2615 = vadd.s32 %v2611, 1
        %v2616 = vsel %vm2614, %v2615, %v2611
        %v2617 = vadd.s32 %v2612, %v2616
        %v2618 = vadd.s32 %v2617, 536870912
        %v2619 = vshrl.u32 %v2618, 30
        %v2620 = vshll.u32 %v2619, 30
        %v2621 = vsub.s32 %v2617, %v2620
        %vm2622 = vcmp.lt.s32.totalorder %v2621, 0
        %v2623 = vsub.s32 0, %v2621
        %v2624 = vsel %vm2622, %v2623, %v2621
        %v2625 = vclz %v2624
        %v2626 = vsub.s32 %v2625, 2
        %vm2627 = vcmp.gt.s32.totalorder 0, %v2626
        %v2628 = vsel %vm2627, 0, %v2626
        %v2629 = vsub.s32 32, %v2628
        %v2630 = vshll.u32 %v2621, %v2628
        %v2631 = vshrl.u32 %v2613, %v2629
        %v2632 = vor.u32 %v2630, %v2631
        %v2633 = vsub.s32 4294967266, %v2628
        %v2634 = vadd.s32 %v2633, 127
        %v2635 = vshll.u32 %v2634, 23
        %v2636 = vor.u32 4788187, %v2635
        %v2637 = vand.u32 2147483647, %v2636
        %v2639 = vcvt.s32.f32 %v2632
        %v2640 = vmul.f32 %v2639, %v2637
        %v2641 = vxor.u32 %v2640, 2147483648
        %v2642 = vsel %vm2559, %v2641, %v2640
        %v2643 = vsub.s32 4, %v2619
        %v2644 = vsel %vm2559, %v2643, %v2619
        %v2645 = vsel %vm2558, %v1506, %v2642
        %v2646 = vsel %vm2558, 0, %v2644
        %v2647 = vcosq.f32.pop %v2645
        %v2648 = vsinq.f32.pop %v2645
        %vm2649 = vweird.f32 %v1506
        %v2650 = vadd.s32 %v2646, 3
        %v2651 = vand.u32 %v2650, 3
        %vm2652 = vcmp.lt.s32.totalorder %v2651, 2
        %vm2653 = vcmp.eq.s32.totalorder %v2651, 0
        %v2654 = vxor.u32 %v2648, 2147483648
        %v2655 = vsel %vm2653, %v2647, %v2654
        %vm2656 = vcmp.eq.s32.totalorder %v2651, 2
        %v2657 = vxor.u32 %v2647, 2147483648
        %v2658 = vsel %vm2656, %v2657, %v2648
        %v2659 = vsel %vm2652, %v2655, %v2658
        %v2660 = vsel %vm2649, nan, %v2659
        %v2661 = vand.u32 2147483647, %v1508
        %vm2662 = vcmp.le.f32.partialorder %v2661, 0.7853982
        %vm2663 = vcmp.lt.s32.totalorder %v1508, 0
        %v2664 = vand.u32 %v1508, 2139095040
        %v2665 = vshrl.u32 %v2664, 23
        %v2666 = vsub.s32 %v2665, 127
        %v2667 = vand.u32 2147483647, %v1508
        %v2668 = vand.u32 %v2667, 8388607
        %v2669 = vor.u32 %v2668, 8388608
        %v2670 = vsub.s32 0, %v2669
        %v2671 = vadd.s32 %v2666, 1
        %vm2672 = vcmp.gt.s32.totalorder %v2671, 0
        %v2673 = vsel %vm2672, %v2671, 0
        %v2674 = vshrl.u32 %v2673, 5
        %v2675 = vand.u32 %v2673, 31
        %v2676 = vsub.s32 32, %v2675
        %v2677 = vshrl.u32 683565275, %v2676
        %v2678 = vshll.u32 683565275, %v2675
        %v2679 = vshrl.u32 2475754826, %v2676
        %v2680 = vor.u32 %v2678, %v2679
        %v2681 = vshll.u32 2475754826, %v2675
        %v2682 = vshrl.u32 2131351028, %v2676
        %v2683 = vor.u32 %v2681, %v2682
        %v2684 = vshll.u32 2131351028, %v2675
        %v2685 = vshrl.u32 2102212464, %v2676
        %v2686 = vor.u32 %v2684, %v2685
        %v2687 = vshll.u32 2102212464, %v2675
        %v2688 = vshrl.u32 920167782, %v2676
        %v2689 = vor.u32 %v2687, %v2688
        %v2690 = vshll.u32 920167782, %v2675
        %v2691 = vshrl.u32 1326507024, %v2676
        %v2692 = vor.u32 %v2690, %v2691
        %vm2693 = vcmp.lt.s32.totalorder %v2674, 1
        %vm2694 = vcmp.lt.s32.totalorder %v2674, 2
        %vm2695 = vcmp.lt.s32.totalorder %v2674, 3
        %vm2696 = vcmp.lt.s32.totalorder %v2674, 4
        %v2697 = vsel %vm2693, %v2677, %v2680
        %v2698 = vsel %vm2696, %v2686, 2102212464
        %v2699 = vsel %vm2695, %v2683, %v2698
        %v2700 = vsel %vm2694, %v2697, %v2699
        %v2701 = vsel %vm2693, %v2680, %v2683
        %v2702 = vsel %vm2696, %v2689, 920167782
        %v2703 = vsel %vm2695, %v2686, %v2702
        %v2704 = vsel %vm2694, %v2701, %v2703
        %v2705 = vsel %vm2693, %v2683, %v2686
        %v2706 = vsel %vm2696, %v2692, 1326507024
        %v2707 = vsel %vm2695, %v2689, %v2706
        %v2708 = vsel %vm2694, %v2705, %v2707
        %v2709 = vshll.u32 %v2669, 8
        %v2710 = vmul.u32.u64.compose %v2709, %v2708
        %v2711 = vextract.low.u32 %v2710
        %v2712 = vextract.high.u32 %v2710
        %v2713 = vmul.u32.u64.compose %v2709, %v2704
        %v2714 = vextract.low.u32 %v2713
        %v2715 = vextract.high.u32 %v2713
        %v2716 = vmul.u32 %v2709, %v2700
        %v2717 = vadd.s32 %v2712, %v2714
        %vm2718 = vc.u32 %v2712, %v2714
        %v2719 = vadd.s32 %v2715, 1
        %v2720 = vsel %vm2718, %v2719, %v2715
        %v2721 = vadd.s32 %v2716, %v2720
        %v2722 = vadd.s32 %v2721, 536870912
        %v2723 = vshrl.u32 %v2722, 30
        %v2724 = vshll.u32 %v2723, 30
        %v2725 = vsub.s32 %v2721, %v2724
        %vm2726 = vcmp.lt.s32.totalorder %v2725, 0
        %v2727 = vsub.s32 0, %v2725
        %v2728 = vsel %vm2726, %v2727, %v2725
        %v2729 = vclz %v2728
        %v2730 = vsub.s32 %v2729, 2
        %vm2731 = vcmp.gt.s32.totalorder 0, %v2730
        %v2732 = vsel %vm2731, 0, %v2730
        %v2733 = vsub.s32 32, %v2732
        %v2734 = vshll.u32 %v2725, %v2732
        %v2735 = vshrl.u32 %v2717, %v2733
        %v2736 = vor.u32 %v2734, %v2735
        %v2737 = vsub.s32 4294967266, %v2732
        %v2738 = vadd.s32 %v2737, 127
        %v2739 = vshll.u32 %v2738, 23
        %v2740 = vor.u32 4788187, %v2739
        %v2741 = vand.u32 2147483647, %v2740
        %v2743 = vcvt.s32.f32 %v2736
        %v2744 = vmul.f32 %v2743, %v2741
        %v2745 = vxor.u32 %v2744, 2147483648
        %v2746 = vsel %vm2663, %v2745, %v2744
        %v2747 = vsub.s32 4, %v2723
        %v2748 = vsel %vm2663, %v2747, %v2723
        %v2749 = vsel %vm2662, %v1508, %v2746
        %v2750 = vsel %vm2662, 0, %v2748
        %v2751 = vcosq.f32.pop %v2749
        %v2752 = vsinq.f32.pop %v2749
        %vm2753 = vweird.f32 %v1508
        %v2754 = vadd.s32 %v2750, 3
        %v2755 = vand.u32 %v2754, 3
        %vm2756 = vcmp.lt.s32.totalorder %v2755, 2
        %vm2757 = vcmp.eq.s32.totalorder %v2755, 0
        %v2758 = vxor.u32 %v2752, 2147483648
        %v2759 = vsel %vm2757, %v2751, %v2758
        %vm2760 = vcmp.eq.s32.totalorder %v2755, 2
        %v2761 = vxor.u32 %v2751, 2147483648
        %v2762 = vsel %vm2760, %v2761, %v2752
        %v2763 = vsel %vm2756, %v2759, %v2762
        %v2764 = vsel %vm2753, nan, %v2763
        %v2765 = vand.u32 2147483647, %v849
        %vm2766 = vcmp.le.f32.partialorder %v2765, 0.7853982
        %vm2767 = vcmp.lt.s32.totalorder %v849, 0
        %v2768 = vand.u32 %v849, 2139095040
        %v2769 = vshrl.u32 %v2768, 23
        %v2770 = vsub.s32 %v2769, 127
        %v2771 = vand.u32 2147483647, %v849
        %v2772 = vand.u32 %v2771, 8388607
        %v2773 = vor.u32 %v2772, 8388608
        %v2774 = vsub.s32 0, %v2773
        %v2775 = vadd.s32 %v2770, 1
        %vm2776 = vcmp.gt.s32.totalorder %v2775, 0
        %v2777 = vsel %vm2776, %v2775, 0
        %v2778 = vshrl.u32 %v2777, 5
        %v2779 = vand.u32 %v2777, 31
        %v2780 = vsub.s32 32, %v2779
        %v2781 = vshrl.u32 683565275, %v2780
        %v2782 = vshll.u32 683565275, %v2779
        %v2783 = vshrl.u32 2475754826, %v2780
        %v2784 = vor.u32 %v2782, %v2783
        %v2785 = vshll.u32 2475754826, %v2779
        %v2786 = vshrl.u32 2131351028, %v2780
        %v2787 = vor.u32 %v2785, %v2786
        %v2788 = vshll.u32 2131351028, %v2779
        %v2789 = vshrl.u32 2102212464, %v2780
        %v2790 = vor.u32 %v2788, %v2789
        %v2791 = vshll.u32 2102212464, %v2779
        %v2792 = vshrl.u32 920167782, %v2780
        %v2793 = vor.u32 %v2791, %v2792
        %v2794 = vshll.u32 920167782, %v2779
        %v2795 = vshrl.u32 1326507024, %v2780
        %v2796 = vor.u32 %v2794, %v2795
        %vm2797 = vcmp.lt.s32.totalorder %v2778, 1
        %vm2798 = vcmp.lt.s32.totalorder %v2778, 2
        %vm2799 = vcmp.lt.s32.totalorder %v2778, 3
        %vm2800 = vcmp.lt.s32.totalorder %v2778, 4
        %v2801 = vsel %vm2797, %v2781, %v2784
        %v2802 = vsel %vm2800, %v2790, 2102212464
        %v2803 = vsel %vm2799, %v2787, %v2802
        %v2804 = vsel %vm2798, %v2801, %v2803
        %v2805 = vsel %vm2797, %v2784, %v2787
        %v2806 = vsel %vm2800, %v2793, 920167782
        %v2807 = vsel %vm2799, %v2790, %v2806
        %v2808 = vsel %vm2798, %v2805, %v2807
        %v2809 = vsel %vm2797, %v2787, %v2790
        %v2810 = vsel %vm2800, %v2796, 1326507024
        %v2811 = vsel %vm2799, %v2793, %v2810
        %v2812 = vsel %vm2798, %v2809, %v2811
        %v2813 = vshll.u32 %v2773, 8
        %v2814 = vmul.u32.u64.compose %v2813, %v2812
        %v2815 = vextract.low.u32 %v2814
        %v2816 = vextract.high.u32 %v2814
        %v2817 = vmul.u32.u64.compose %v2813, %v2808
        %v2818 = vextract.low.u32 %v2817
        %v2819 = vextract.high.u32 %v2817
        %v2820 = vmul.u32 %v2813, %v2804
        %v2821 = vadd.s32 %v2816, %v2818
        %vm2822 = vc.u32 %v2816, %v2818
        %v2823 = vadd.s32 %v2819, 1
        %v2824 = vsel %vm2822, %v2823, %v2819
        %v2825 = vadd.s32 %v2820, %v2824
        %v2826 = vadd.s32 %v2825, 536870912
        %v2827 = vshrl.u32 %v2826, 30
        %v2828 = vshll.u32 %v2827, 30
        %v2829 = vsub.s32 %v2825, %v2828
        %vm2830 = vcmp.lt.s32.totalorder %v2829, 0
        %v2831 = vsub.s32 0, %v2829
        %v2832 = vsel %vm2830, %v2831, %v2829
        %v2833 = vclz %v2832
        %v2834 = vsub.s32 %v2833, 2
        %vm2835 = vcmp.gt.s32.totalorder 0, %v2834
        %v2836 = vsel %vm2835, 0, %v2834
        %v2837 = vsub.s32 32, %v2836
        %v2838 = vshll.u32 %v2829, %v2836
        %v2839 = vshrl.u32 %v2821, %v2837
        %v2840 = vor.u32 %v2838, %v2839
        %v2841 = vsub.s32 4294967266, %v2836
        %v2842 = vadd.s32 %v2841, 127
        %v2843 = vshll.u32 %v2842, 23
        %v2844 = vor.u32 4788187, %v2843
        %v2845 = vand.u32 2147483647, %v2844
        %v2847 = vcvt.s32.f32 %v2840
        %v2848 = vmul.f32 %v2847, %v2845
        %v2849 = vxor.u32 %v2848, 2147483648
        %v2850 = vsel %vm2767, %v2849, %v2848
        %v2851 = vsub.s32 4, %v2827
        %v2852 = vsel %vm2767, %v2851, %v2827
        %v2853 = vsel %vm2766, %v849, %v2850
        %v2854 = vsel %vm2766, 0, %v2852
        %v2855 = vcosq.f32.pop %v2853
        %v2856 = vsinq.f32.pop %v2853
        %vm2857 = vweird.f32 %v849
        %v2858 = vadd.s32 %v2854, 3
        %v2859 = vand.u32 %v2858, 3
        %vm2860 = vcmp.lt.s32.totalorder %v2859, 2
        %vm2861 = vcmp.eq.s32.totalorder %v2859, 0
        %v2862 = vxor.u32 %v2856, 2147483648
        %v2863 = vsel %vm2861, %v2855, %v2862
        %vm2864 = vcmp.eq.s32.totalorder %v2859, 2
        %v2865 = vxor.u32 %v2855, 2147483648
        %v2866 = vsel %vm2864, %v2865, %v2856
        %v2867 = vsel %vm2860, %v2863, %v2866
        %v2868 = vsel %vm2857, nan, %v2867
        %v2869 = vand.u32 2147483647, %v851
        %vm2870 = vcmp.le.f32.partialorder %v2869, 0.7853982
        %vm2871 = vcmp.lt.s32.totalorder %v851, 0
        %v2872 = vand.u32 %v851, 2139095040
        %v2873 = vshrl.u32 %v2872, 23
        %v2874 = vsub.s32 %v2873, 127
        %v2875 = vand.u32 2147483647, %v851
        %v2876 = vand.u32 %v2875, 8388607
        %v2877 = vor.u32 %v2876, 8388608
        %v2878 = vsub.s32 0, %v2877
        %v2879 = vadd.s32 %v2874, 1
        %vm2880 = vcmp.gt.s32.totalorder %v2879, 0
        %v2881 = vsel %vm2880, %v2879, 0
        %v2882 = vshrl.u32 %v2881, 5
        %v2883 = vand.u32 %v2881, 31
        %v2884 = vsub.s32 32, %v2883
        %v2885 = vshrl.u32 683565275, %v2884
        %v2886 = vshll.u32 683565275, %v2883
        %v2887 = vshrl.u32 2475754826, %v2884
        %v2888 = vor.u32 %v2886, %v2887
        %v2889 = vshll.u32 2475754826, %v2883
        %v2890 = vshrl.u32 2131351028, %v2884
        %v2891 = vor.u32 %v2889, %v2890
        %v2892 = vshll.u32 2131351028, %v2883
        %v2893 = vshrl.u32 2102212464, %v2884
        %v2894 = vor.u32 %v2892, %v2893
        %v2895 = vshll.u32 2102212464, %v2883
        %v2896 = vshrl.u32 920167782, %v2884
        %v2897 = vor.u32 %v2895, %v2896
        %v2898 = vshll.u32 920167782, %v2883
        %v2899 = vshrl.u32 1326507024, %v2884
        %v2900 = vor.u32 %v2898, %v2899
        %vm2901 = vcmp.lt.s32.totalorder %v2882, 1
        %vm2902 = vcmp.lt.s32.totalorder %v2882, 2
        %vm2903 = vcmp.lt.s32.totalorder %v2882, 3
        %vm2904 = vcmp.lt.s32.totalorder %v2882, 4
        %v2905 = vsel %vm2901, %v2885, %v2888
        %v2906 = vsel %vm2904, %v2894, 2102212464
        %v2907 = vsel %vm2903, %v2891, %v2906
        %v2908 = vsel %vm2902, %v2905, %v2907
        %v2909 = vsel %vm2901, %v2888, %v2891
        %v2910 = vsel %vm2904, %v2897, 920167782
        %v2911 = vsel %vm2903, %v2894, %v2910
        %v2912 = vsel %vm2902, %v2909, %v2911
        %v2913 = vsel %vm2901, %v2891, %v2894
        %v2914 = vsel %vm2904, %v2900, 1326507024
        %v2915 = vsel %vm2903, %v2897, %v2914
        %v2916 = vsel %vm2902, %v2913, %v2915
        %v2917 = vshll.u32 %v2877, 8
        %v2918 = vmul.u32.u64.compose %v2917, %v2916
        %v2919 = vextract.low.u32 %v2918
        %v2920 = vextract.high.u32 %v2918
        %v2921 = vmul.u32.u64.compose %v2917, %v2912
        %v2922 = vextract.low.u32 %v2921
        %v2923 = vextract.high.u32 %v2921
        %v2924 = vmul.u32 %v2917, %v2908
        %v2925 = vadd.s32 %v2920, %v2922
        %vm2926 = vc.u32 %v2920, %v2922
        %v2927 = vadd.s32 %v2923, 1
        %v2928 = vsel %vm2926, %v2927, %v2923
        %v2929 = vadd.s32 %v2924, %v2928
        %v2930 = vadd.s32 %v2929, 536870912
        %v2931 = vshrl.u32 %v2930, 30
        %v2932 = vshll.u32 %v2931, 30
        %v2933 = vsub.s32 %v2929, %v2932
        %vm2934 = vcmp.lt.s32.totalorder %v2933, 0
        %v2935 = vsub.s32 0, %v2933
        %v2936 = vsel %vm2934, %v2935, %v2933
        %v2937 = vclz %v2936
        %v2938 = vsub.s32 %v2937, 2
        %vm2939 = vcmp.gt.s32.totalorder 0, %v2938
        %v2940 = vsel %vm2939, 0, %v2938
        %v2941 = vsub.s32 32, %v2940
        %v2942 = vshll.u32 %v2933, %v2940
        %v2943 = vshrl.u32 %v2925, %v2941
        %v2944 = vor.u32 %v2942, %v2943
        %v2945 = vsub.s32 4294967266, %v2940
        %v2946 = vadd.s32 %v2945, 127
        %v2947 = vshll.u32 %v2946, 23
        %v2948 = vor.u32 4788187, %v2947
        %v2949 = vand.u32 2147483647, %v2948
        %v2951 = vcvt.s32.f32 %v2944
        %v2952 = vmul.f32 %v2951, %v2949
        %v2953 = vxor.u32 %v2952, 2147483648
        %v2954 = vsel %vm2871, %v2953, %v2952
        %v2955 = vsub.s32 4, %v2931
        %v2956 = vsel %vm2871, %v2955, %v2931
        %v2957 = vsel %vm2870, %v851, %v2954
        %v2958 = vsel %vm2870, 0, %v2956
        %v2959 = vcosq.f32.pop %v2957
        %v2960 = vsinq.f32.pop %v2957
        %vm2961 = vweird.f32 %v851
        %v2962 = vadd.s32 %v2958, 3
        %v2963 = vand.u32 %v2962, 3
        %vm2964 = vcmp.lt.s32.totalorder %v2963, 2
        %vm2965 = vcmp.eq.s32.totalorder %v2963, 0
        %v2966 = vxor.u32 %v2960, 2147483648
        %v2967 = vsel %vm2965, %v2959, %v2966
        %vm2968 = vcmp.eq.s32.totalorder %v2963, 2
        %v2969 = vxor.u32 %v2959, 2147483648
        %v2970 = vsel %vm2968, %v2969, %v2960
        %v2971 = vsel %vm2964, %v2967, %v2970
        %v2972 = vsel %vm2961, nan, %v2971
        %v2973 = vand.u32 2147483647, %v1513
        %vm2974 = vcmp.le.f32.partialorder %v2973, 0.7853982
        %vm2975 = vcmp.lt.s32.totalorder %v1513, 0
        %v2976 = vand.u32 %v1513, 2139095040
        %v2977 = vshrl.u32 %v2976, 23
        %v2978 = vsub.s32 %v2977, 127
        %v2979 = vand.u32 2147483647, %v1513
        %v2980 = vand.u32 %v2979, 8388607
        %v2981 = vor.u32 %v2980, 8388608
        %v2982 = vsub.s32 0, %v2981
        %v2983 = vadd.s32 %v2978, 1
        %vm2984 = vcmp.gt.s32.totalorder %v2983, 0
        %v2985 = vsel %vm2984, %v2983, 0
        %v2986 = vshrl.u32 %v2985, 5
        %v2987 = vand.u32 %v2985, 31
        %v2988 = vsub.s32 32, %v2987
        %v2989 = vshrl.u32 683565275, %v2988
        %v2990 = vshll.u32 683565275, %v2987
        %v2991 = vshrl.u32 2475754826, %v2988
        %v2992 = vor.u32 %v2990, %v2991
        %v2993 = vshll.u32 2475754826, %v2987
        %v2994 = vshrl.u32 2131351028, %v2988
        %v2995 = vor.u32 %v2993, %v2994
        %v2996 = vshll.u32 2131351028, %v2987
        %v2997 = vshrl.u32 2102212464, %v2988
        %v2998 = vor.u32 %v2996, %v2997
        %v2999 = vshll.u32 2102212464, %v2987
        %v3000 = vshrl.u32 920167782, %v2988
        %v3001 = vor.u32 %v2999, %v3000
        %v3002 = vshll.u32 920167782, %v2987
        %v3003 = vshrl.u32 1326507024, %v2988
        %v3004 = vor.u32 %v3002, %v3003
        %vm3005 = vcmp.lt.s32.totalorder %v2986, 1
        %vm3006 = vcmp.lt.s32.totalorder %v2986, 2
        %vm3007 = vcmp.lt.s32.totalorder %v2986, 3
        %vm3008 = vcmp.lt.s32.totalorder %v2986, 4
        %v3009 = vsel %vm3005, %v2989, %v2992
        %v3010 = vsel %vm3008, %v2998, 2102212464
        %v3011 = vsel %vm3007, %v2995, %v3010
        %v3012 = vsel %vm3006, %v3009, %v3011
        %v3013 = vsel %vm3005, %v2992, %v2995
        %v3014 = vsel %vm3008, %v3001, 920167782
        %v3015 = vsel %vm3007, %v2998, %v3014
        %v3016 = vsel %vm3006, %v3013, %v3015
        %v3017 = vsel %vm3005, %v2995, %v2998
        %v3018 = vsel %vm3008, %v3004, 1326507024
        %v3019 = vsel %vm3007, %v3001, %v3018
        %v3020 = vsel %vm3006, %v3017, %v3019
        %v3021 = vshll.u32 %v2981, 8
        %v3022 = vmul.u32.u64.compose %v3021, %v3020
        %v3023 = vextract.low.u32 %v3022
        %v3024 = vextract.high.u32 %v3022
        %v3025 = vmul.u32.u64.compose %v3021, %v3016
        %v3026 = vextract.low.u32 %v3025
        %v3027 = vextract.high.u32 %v3025
        %v3028 = vmul.u32 %v3021, %v3012
        %v3029 = vadd.s32 %v3024, %v3026
        %vm3030 = vc.u32 %v3024, %v3026
        %v3031 = vadd.s32 %v3027, 1
        %v3032 = vsel %vm3030, %v3031, %v3027
        %v3033 = vadd.s32 %v3028, %v3032
        %v3034 = vadd.s32 %v3033, 536870912
        %v3035 = vshrl.u32 %v3034, 30
        %v3036 = vshll.u32 %v3035, 30
        %v3037 = vsub.s32 %v3033, %v3036
        %vm3038 = vcmp.lt.s32.totalorder %v3037, 0
        %v3039 = vsub.s32 0, %v3037
        %v3040 = vsel %vm3038, %v3039, %v3037
        %v3041 = vclz %v3040
        %v3042 = vsub.s32 %v3041, 2
        %vm3043 = vcmp.gt.s32.totalorder 0, %v3042
        %v3044 = vsel %vm3043, 0, %v3042
        %v3045 = vsub.s32 32, %v3044
        %v3046 = vshll.u32 %v3037, %v3044
        %v3047 = vshrl.u32 %v3029, %v3045
        %v3048 = vor.u32 %v3046, %v3047
        %v3049 = vsub.s32 4294967266, %v3044
        %v3050 = vadd.s32 %v3049, 127
        %v3051 = vshll.u32 %v3050, 23
        %v3052 = vor.u32 4788187, %v3051
        %v3053 = vand.u32 2147483647, %v3052
        %v3055 = vcvt.s32.f32 %v3048
        %v3056 = vmul.f32 %v3055, %v3053
        %v3057 = vxor.u32 %v3056, 2147483648
        %v3058 = vsel %vm2975, %v3057, %v3056
        %v3059 = vsub.s32 4, %v3035
        %v3060 = vsel %vm2975, %v3059, %v3035
        %v3061 = vsel %vm2974, %v1513, %v3058
        %v3062 = vsel %vm2974, 0, %v3060
        %v3063 = vcosq.f32.pop %v3061
        %v3064 = vsinq.f32.pop %v3061
        %vm3065 = vweird.f32 %v1513
        %v3066 = vadd.s32 %v3062, 3
        %v3067 = vand.u32 %v3066, 3
        %vm3068 = vcmp.lt.s32.totalorder %v3067, 2
        %vm3069 = vcmp.eq.s32.totalorder %v3067, 0
        %v3070 = vxor.u32 %v3064, 2147483648
        %v3071 = vsel %vm3069, %v3063, %v3070
        %vm3072 = vcmp.eq.s32.totalorder %v3067, 2
        %v3073 = vxor.u32 %v3063, 2147483648
        %v3074 = vsel %vm3072, %v3073, %v3064
        %v3075 = vsel %vm3068, %v3071, %v3074
        %v3076 = vsel %vm3065, nan, %v3075
        %v3077 = vand.u32 2147483647, %v1515
        %vm3078 = vcmp.le.f32.partialorder %v3077, 0.7853982
        %vm3079 = vcmp.lt.s32.totalorder %v1515, 0
        %v3080 = vand.u32 %v1515, 2139095040
        %v3081 = vshrl.u32 %v3080, 23
        %v3082 = vsub.s32 %v3081, 127
        %v3083 = vand.u32 2147483647, %v1515
        %v3084 = vand.u32 %v3083, 8388607
        %v3085 = vor.u32 %v3084, 8388608
        %v3086 = vsub.s32 0, %v3085
        %v3087 = vadd.s32 %v3082, 1
        %vm3088 = vcmp.gt.s32.totalorder %v3087, 0
        %v3089 = vsel %vm3088, %v3087, 0
        %v3090 = vshrl.u32 %v3089, 5
        %v3091 = vand.u32 %v3089, 31
        %v3092 = vsub.s32 32, %v3091
        %v3093 = vshrl.u32 683565275, %v3092
        %v3094 = vshll.u32 683565275, %v3091
        %v3095 = vshrl.u32 2475754826, %v3092
        %v3096 = vor.u32 %v3094, %v3095
        %v3097 = vshll.u32 2475754826, %v3091
        %v3098 = vshrl.u32 2131351028, %v3092
        %v3099 = vor.u32 %v3097, %v3098
        %v3100 = vshll.u32 2131351028, %v3091
        %v3101 = vshrl.u32 2102212464, %v3092
        %v3102 = vor.u32 %v3100, %v3101
        %v3103 = vshll.u32 2102212464, %v3091
        %v3104 = vshrl.u32 920167782, %v3092
        %v3105 = vor.u32 %v3103, %v3104
        %v3106 = vshll.u32 920167782, %v3091
        %v3107 = vshrl.u32 1326507024, %v3092
        %v3108 = vor.u32 %v3106, %v3107
        %vm3109 = vcmp.lt.s32.totalorder %v3090, 1
        %vm3110 = vcmp.lt.s32.totalorder %v3090, 2
        %vm3111 = vcmp.lt.s32.totalorder %v3090, 3
        %vm3112 = vcmp.lt.s32.totalorder %v3090, 4
        %v3113 = vsel %vm3109, %v3093, %v3096
        %v3114 = vsel %vm3112, %v3102, 2102212464
        %v3115 = vsel %vm3111, %v3099, %v3114
        %v3116 = vsel %vm3110, %v3113, %v3115
        %v3117 = vsel %vm3109, %v3096, %v3099
        %v3118 = vsel %vm3112, %v3105, 920167782
        %v3119 = vsel %vm3111, %v3102, %v3118
        %v3120 = vsel %vm3110, %v3117, %v3119
        %v3121 = vsel %vm3109, %v3099, %v3102
        %v3122 = vsel %vm3112, %v3108, 1326507024
        %v3123 = vsel %vm3111, %v3105, %v3122
        %v3124 = vsel %vm3110, %v3121, %v3123
        %v3125 = vshll.u32 %v3085, 8
        %v3126 = vmul.u32.u64.compose %v3125, %v3124
        %v3127 = vextract.low.u32 %v3126
        %v3128 = vextract.high.u32 %v3126
        %v3129 = vmul.u32.u64.compose %v3125, %v3120
        %v3130 = vextract.low.u32 %v3129
        %v3131 = vextract.high.u32 %v3129
        %v3132 = vmul.u32 %v3125, %v3116
        %v3133 = vadd.s32 %v3128, %v3130
        %vm3134 = vc.u32 %v3128, %v3130
        %v3135 = vadd.s32 %v3131, 1
        %v3136 = vsel %vm3134, %v3135, %v3131
        %v3137 = vadd.s32 %v3132, %v3136
        %v3138 = vadd.s32 %v3137, 536870912
        %v3139 = vshrl.u32 %v3138, 30
        %v3140 = vshll.u32 %v3139, 30
        %v3141 = vsub.s32 %v3137, %v3140
        %vm3142 = vcmp.lt.s32.totalorder %v3141, 0
        %v3143 = vsub.s32 0, %v3141
        %v3144 = vsel %vm3142, %v3143, %v3141
        %v3145 = vclz %v3144
        %v3146 = vsub.s32 %v3145, 2
        %vm3147 = vcmp.gt.s32.totalorder 0, %v3146
        %v3148 = vsel %vm3147, 0, %v3146
        %v3149 = vsub.s32 32, %v3148
        %v3150 = vshll.u32 %v3141, %v3148
        %v3151 = vshrl.u32 %v3133, %v3149
        %v3152 = vor.u32 %v3150, %v3151
        %v3153 = vsub.s32 4294967266, %v3148
        %v3154 = vadd.s32 %v3153, 127
        %v3155 = vshll.u32 %v3154, 23
        %v3156 = vor.u32 4788187, %v3155
        %v3157 = vand.u32 2147483647, %v3156
        %v3159 = vcvt.s32.f32 %v3152
        %v3160 = vmul.f32 %v3159, %v3157
        %v3161 = vxor.u32 %v3160, 2147483648
        %v3162 = vsel %vm3079, %v3161, %v3160
        %v3163 = vsub.s32 4, %v3139
        %v3164 = vsel %vm3079, %v3163, %v3139
        %v3165 = vsel %vm3078, %v1515, %v3162
        %v3166 = vsel %vm3078, 0, %v3164
        %v3167 = vcosq.f32.pop %v3165
        %v3168 = vsinq.f32.pop %v3165
        %vm3169 = vweird.f32 %v1515
        %v3170 = vadd.s32 %v3166, 3
        %v3171 = vand.u32 %v3170, 3
        %vm3172 = vcmp.lt.s32.totalorder %v3171, 2
        %vm3173 = vcmp.eq.s32.totalorder %v3171, 0
        %v3174 = vxor.u32 %v3168, 2147483648
        %v3175 = vsel %vm3173, %v3167, %v3174
        %vm3176 = vcmp.eq.s32.totalorder %v3171, 2
        %v3177 = vxor.u32 %v3167, 2147483648
        %v3178 = vsel %vm3176, %v3177, %v3168
        %v3179 = vsel %vm3172, %v3175, %v3178
        %v3180 = vsel %vm3169, nan, %v3179
        %3181 = vst [vmem:[%s152] sm:$0xff] %v1620
        %3182 = vst [vmem:[%s152 + $0x8] sm:$0xff] %v1724
        %3183 = vst [vmem:[%s152 + $0x10] sm:$0xff] %v1828
        %3184 = vst [vmem:[%s152 + $0x18] sm:$0xff] %v1932
        %3185 = vst [vmem:[%s152 + $0x20] sm:$0xff] %v2036
        %3186 = vst [vmem:[%s152 + $0x28] sm:$0xff] %v2140
        %3187 = vst [vmem:[%s152 + $0x30] sm:$0xff] %v2244
        %3188 = vst [vmem:[%s152 + $0x38] sm:$0xff] %v2348
        %3189 = vst [vmem:[%s152 + $0x40] sm:$0xff] %v2452
        %3190 = vst [vmem:[%s152 + $0x48] sm:$0xff] %v2556
        %3191 = vst [vmem:[%s152 + $0x50] sm:$0xff] %v2660
        %3192 = vst [vmem:[%s152 + $0x58] sm:$0xff] %v2764
        %3193 = vst [vmem:[%s152 + $0x60] sm:$0xff] %v2868
        %3194 = vst [vmem:[%s152 + $0x68] sm:$0xff] %v2972
        %3195 = vst [vmem:[%s152 + $0x70] sm:$0xff] %v3076
        %3196 = vst [vmem:[%s152 + $0x78] sm:$0xff] %v3180
        %s3197 = sand.u32 %s72, 1
        %s3198 = scalar_lea.sflag [#allocation4], %s3197
        %s3199 = sand.u32 %s72, 1
        %s3200 = smul.addr %s3199, 128
        %s3201 = scalar_lea.vmem [#allocation5], %s3200
        // Predicated region
        $region33: #{tpu_custom_call.1} parent=27 // pred_check
          %p3202 = pneg %p82
        $region34: #{tpu_custom_call.1} parent=27 // pred_check_branch
          %3204 = sbr.rel (%p3202) target = $region36
        $region35: #{tpu_custom_call.1} parent=27 // pred_region
          %s3205 = smul.u32 4, %s17
          %s3207 = ssub.s32 2048, 2048
          %3208 = vsyncadd %s3198, %s3207
          %s3209 = smul.addr %s3205, 4
          %s3210 = smul.addr %s3209, 128
          %s3211 = scalar_lea.hbm %s2, %s3210
          %s3212 = sshll.u32 %s3201, 4
          %s3213 = int_to_ptr.vmem [resolvable:$true] %s3212
          %3218 = dma.vmem_to_hbm [thread:$0]  %s3213, 2048, %s3211, %s3198, 512, 512, 32
        $region36: #{tpu_custom_call.1} parent=27 // pred_fallthru
          _
      $region28: #{tpu_custom_call.1} parent=5 // pred_fallthru
        _
      %p3219 = scmp.le.s32.totalorder 2, %s12
      // Predicated region
      $region37: #{tpu_custom_call.1} parent=5 // pred_check
        %p3220 = pneg %p3219
      $region38: #{tpu_custom_call.1} parent=5 // pred_check_branch
        %3222 = sbr.rel (%p3220) target = $region40
      $region39: #{tpu_custom_call.1} parent=5 // pred_region
        %s3223 = ssub.s32 %s12, 2
        // Predicated region
        $region41: #{tpu_custom_call.1} parent=39 // pred_check
          %p3224 = pneg %p88
        $region42: #{tpu_custom_call.1} parent=39 // pred_check_branch
          %3226 = sbr.rel (%p3224) target = $region44
        $region43: #{tpu_custom_call.1} parent=39 // pred_region
          %s3227 = sand.u32 %s73, 1
          %s3228 = scalar_lea.sflag [#allocation4], %s3227
          %s3229 = sand.u32 %s73, 1
          %s3230 = smul.addr %s3229, 128
          %s3231 = scalar_lea.vmem [#allocation5], %s3230
          %3232 = dma.done %s3228, 2048
        $region44: #{tpu_custom_call.1} parent=39 // pred_fallthru
          _
      $region40: #{tpu_custom_call.1} parent=5 // pred_fallthru
        _
    $region6: #{tpu_custom_call.1} parent=1 // loop_footer
      %s16 = sadd.s32 1, %s12
    $region7: #{tpu_custom_call.1} parent=1 // loop_footer_branch
      %11 = sbr.rel target = $region3
    $region8: #{tpu_custom_call.1} parent=1 // loop_exit
      _
    %3233 = vsyncpa [#allocation3], 1
    %s3234 = scalar_lea.sflag [#allocation3], 1
    %3235 = vsyncpa %s3234, 1
    %3236 = vsyncpa [#allocation4], 1
    %s3237 = scalar_lea.sflag [#allocation4], 1
    %3238 = vsyncpa %s3237, 1

</llo_original>
